<compile_context>
chip_gen: v7x
topology: tpu7x:2x2x1
jax: 0.10.0
libtpu: 0.0.40
codegen_flags: <defaults>
</compile_context>

<pallas_src>
import functools

import jax
import jax.numpy as jnp
from jax.experimental import pallas as pl
from jax.experimental.pallas import tpu as pltpu

HIDDEN = 32          # real hidden width of the module
LRELU_SLOPE = 0.01   # torch.nn.LeakyReLU default
BN_EPS = 1e-5        # torch.nn.BatchNorm1d default
NORM_EPS = 1e-12     # torch.nn.functional.normalize default

LANE = 128           # TPU lane width
HP = 128             # padded hidden width (lane-dense)
TM = 256             # node-row tile (output rows per grid step)
TK = 256             # source-node tile (aggregation K axis)
TE = 256             # edges per decoder grid step


def _round_up(x, m):
    return ((x + m - 1) // m) * m


def _pad2(a, rows, cols):
    return jnp.pad(a, ((0, rows - a.shape[0]), (0, cols - a.shape[1])))


# --------------------------------------------------------------------------
# Encoder layer kernel:
#   agg = sum_k A[i, k] @ H_bf16[k]             (bf16 MXU, f32 accumulate)
#   h   = agg @ Wl + H_f32[i] @ Wr + b          (BN folded into Wl/Wr/b)
#   h   = LeakyReLU(h); h = h / max(||h||_2, eps)
#   out = h @ Wp + bp                           (layer 2 only: fused post_linear)
# Grid: (node-row tiles "parallel", source-node tiles "arbitrary").
# --------------------------------------------------------------------------
def sage_layer_kernel(a_ref, hnb_ref, hi_ref, wl_ref, wr_ref, b_ref, *rest,
                      apply_post):
    if apply_post:
        wp_ref, bp_ref, out_ref, acc_ref = rest
        out_bf16_ref = None
    else:
        wp_ref = bp_ref = None
        out_ref, out_bf16_ref, acc_ref = rest

    k = pl.program_id(1)

    @pl.when(k == 0)
    def _():
        acc_ref[...] = jnp.zeros_like(acc_ref)

    # N^2-scaled term: both operands bf16 on the MXU, f32 accumulation in VMEM.
    acc_ref[...] += jnp.dot(a_ref[...], hnb_ref[...],
                            preferred_element_type=jnp.float32)

    @pl.when(k == pl.num_programs(1) - 1)
    def _():
        h = (jnp.dot(acc_ref[...], wl_ref[...],
                     preferred_element_type=jnp.float32)
             + jnp.dot(hi_ref[...], wr_ref[...],
                       preferred_element_type=jnp.float32)
             + b_ref[...])
        # BatchNorm (eval mode) is folded into wl / wr / b.  Dropout = identity.
        h = jnp.where(h >= 0, h, LRELU_SLOPE * h)                 # LeakyReLU
        # F.normalize(x, 2, -1) = x / max(||x||, eps); rsqrt runs on the EUP.
        ssq = jnp.sum(h * h, axis=-1, keepdims=True)
        h = h * jax.lax.rsqrt(jnp.maximum(ssq, NORM_EPS * NORM_EPS))
        if apply_post:
            h = jnp.dot(h, wp_ref[...],
                        preferred_element_type=jnp.float32) + bp_ref[...]
            out_ref[...] = h
        else:
            out_ref[...] = h
            out_bf16_ref[...] = h.astype(jnp.bfloat16)   # feeds layer 2 neighbors


def _sage_layer(adj_bf16, h_f32, h_bf16, wl, wr, b, wp=None, bp=None):
    np_, fp = h_f32.shape
    apply_post = wp is not None

    ins = [adj_bf16, h_bf16, h_f32, wl, wr, b]
    in_specs = [
        pl.BlockSpec((TM, TK), lambda i, k: (i, k)),   # adjacency tile (bf16)
        pl.BlockSpec((TK, fp), lambda i, k: (k, 0)),   # neighbor feats (bf16)
        pl.BlockSpec((TM, fp), lambda i, k: (i, 0)),   # self feats (f32, k-invariant)
        pl.BlockSpec((fp, HP), lambda i, k: (0, 0)),   # lin_l (BN folded)
        pl.BlockSpec((fp, HP), lambda i, k: (0, 0)),   # lin_r (BN folded)
        pl.BlockSpec((1, HP), lambda i, k: (0, 0)),    # bias  (BN folded)
    ]
    if apply_post:
        ins += [wp, bp]
        in_specs += [pl.BlockSpec((HP, HP), lambda i, k: (0, 0)),
                     pl.BlockSpec((1, HP), lambda i, k: (0, 0))]
        out_shape = jax.ShapeDtypeStruct((np_, HP), jnp.float32)
        out_specs = pl.BlockSpec((TM, HP), lambda i, k: (i, 0))
    else:
        out_shape = (jax.ShapeDtypeStruct((np_, HP), jnp.float32),
                     jax.ShapeDtypeStruct((np_, HP), jnp.bfloat16))
        out_specs = (pl.BlockSpec((TM, HP), lambda i, k: (i, 0)),
                     pl.BlockSpec((TM, HP), lambda i, k: (i, 0)))

    kernel = functools.partial(sage_layer_kernel, apply_post=apply_post)
    return pl.pallas_call(
        kernel,
        out_shape=out_shape,
        grid=(np_ // TM, np_ // TK),
        in_specs=in_specs,
        out_specs=out_specs,
        scratch_shapes=[pltpu.VMEM((TM, fp), jnp.float32)],
        compiler_params=pltpu.CompilerParams(
            dimension_semantics=("parallel", "arbitrary"),
            vmem_limit_bytes=32 * 1024 * 1024),
    )(*ins)


# --------------------------------------------------------------------------
# Decoder kernel: edges on lanes, features on sublanes -> lane-dense (1, TE)
# output per grid step.  pred = sigmoid(sum_d s[d, e] * t[d, e]).
# --------------------------------------------------------------------------
def decoder_kernel(s_ref, t_ref, out_ref):
    p = jnp.sum(s_ref[...] * t_ref[...], axis=0, keepdims=True)   # (1, TE)
    out_ref[...] = 1.0 / (1.0 + jnp.exp(-p))


# --------------------------------------------------------------------------
# Wrappers (glue only: padding, adjacency build, endpoint gather)
# --------------------------------------------------------------------------
def run_encoder(x, edge_index, params):
    n, f = x.shape
    np_ = _round_up(max(n, 1), max(TM, TK))
    fp = _round_up(max(f, 1), LANE)

    # Dense, tiled adjacency: A[t, s] += 1  (sum aggregation of x[s] at t).
    # Counts are small integers -> exact in bf16; halves HBM/VMEM traffic of
    # the only N^2-sized array and doubles MXU rate for the aggregation.
    src, tgt = edge_index[0], edge_index[1]
    adj = jnp.zeros((np_, np_), jnp.float32).at[tgt, src].add(1.0)
    adj = adj.astype(jnp.bfloat16)
    # TODO(synk): for large sparse graphs replace the tiled dense adjacency with
    # a CSR / sorted-edge aggregation kernel driven by PrefetchScalarGridSpec.

    xp = _pad2(x.astype(jnp.float32), np_, fp)
    xp_bf16 = xp.astype(jnp.bfloat16)

    h1_f32, h1_bf16 = _sage_layer(adj, xp, xp_bf16,
                                  params["w1l"], params["w1r"], params["b1"])
    z = _sage_layer(adj, h1_f32, h1_bf16,
                    params["w2l"], params["w2r"], params["b2"],
                    params["wp"], params["bp"])
    return z[:n, :HIDDEN]


def run_decoder(z, src_idx, tgt_idx):
    e = src_idx.shape[0]
    ep = _round_up(max(e, 1), TE)
    src_p = jnp.pad(src_idx, (0, ep - e))
    tgt_p = jnp.pad(tgt_idx, (0, ep - e))
    # Endpoint gather stays in XLA (one fused gather); the kernel is fed
    # feature-major (HIDDEN, E) slabs so its output row is lane-dense.
    s_t = z[src_p].T                       # (HIDDEN, ep)
    t_t = z[tgt_p].T                       # (HIDDEN, ep)
    out = pl.pallas_call(
        decoder_kernel,
        out_shape=jax.ShapeDtypeStruct((1, ep), jnp.float32),
        grid=(ep // TE,),
        in_specs=[pl.BlockSpec((HIDDEN, TE), lambda eb: (0, eb)),
                  pl.BlockSpec((HIDDEN, TE), lambda eb: (0, eb))],
        out_specs=pl.BlockSpec((1, TE), lambda eb: (0, eb)),
        compiler_params=pltpu.CompilerParams(
            dimension_semantics=("parallel",),
            vmem_limit_bytes=32 * 1024 * 1024),
    )(s_t, t_t)
    return out[0, :e]


EDGE_TYPE = ("n", "to", "n")               # single supervision type
SUPERVISION_TYPES = [EDGE_TYPE]


def model_forward(x_dict, edge_index_dict, edge_label_index_dict, params,
                  return_tensor=None):
    z = run_encoder(x_dict["n"], edge_index_dict[EDGE_TYPE], params)
    pred_dict = {}
    for et in SUPERVISION_TYPES:
        eli = edge_label_index_dict[et]
        pred_dict[et] = run_decoder(z, eli[0], eli[1])
    if return_tensor is not None:
        return pred_dict[SUPERVISION_TYPES[return_tensor]]
    return pred_dict


# --------------------------------------------------------------------------
# Parameters: torch-shaped init, then eval-mode BN folding + lane padding.
# --------------------------------------------------------------------------
def init_params(key, in_feat):
    ks = jax.random.split(key, 16)
    nrm = lambda k, shp: (0.1 * jax.random.normal(k, shp)).astype(jnp.float32)
    row = lambda k: nrm(k, (1, HIDDEN))
    return {
        # SAGEConv(-1 -> 32): lin_l (bias), lin_r (no bias); stored (in, out)
        "w1l": nrm(ks[0], (in_feat, HIDDEN)), "b1l": row(ks[1]),
        "w1r": nrm(ks[2], (in_feat, HIDDEN)),
        # BatchNorm1d(32) eval-mode params / running stats
        "g1": 1.0 + row(ks[3]), "be1": row(ks[4]),
        "m1": 0.05 * row(ks[5]),
        "v1": 1.0 + 0.1 * jnp.abs(row(ks[6])),
        # SAGEConv(32 -> 32)
        "w2l": nrm(ks[7], (HIDDEN, HIDDEN)), "b2l": row(ks[8]),
        "w2r": nrm(ks[9], (HIDDEN, HIDDEN)),
        "g2": 1.0 + row(ks[10]), "be2": row(ks[11]),
        "m2": 0.05 * row(ks[12]),
        "v2": 1.0 + 0.1 * jnp.abs(row(ks[13])),
        # post_linear: Linear(32, 32)
        "wp": nrm(ks[14], (HIDDEN, HIDDEN)), "bp": row(ks[15]),
    }


def _fold_bn(wl, wr, b, gamma, beta, mean, var):
    # BN(y) = y * s + t with s = gamma * rsqrt(var + eps), t = beta - mean * s
    s = gamma * jax.lax.rsqrt(var + BN_EPS)
    return wl * s, wr * s, b * s + (beta - mean * s)


def prepare_params(raw, in_feat):
    fp1 = _round_up(max(in_feat, 1), LANE)
    w1l, w1r, b1 = _fold_bn(raw["w1l"], raw["w1r"], raw["b1l"],
                            raw["g1"], raw["be1"], raw["m1"], raw["v1"])
    w2l, w2r, b2 = _fold_bn(raw["w2l"], raw["w2r"], raw["b2l"],
                            raw["g2"], raw["be2"], raw["m2"], raw["v2"])
    return {
        "w1l": _pad2(w1l, fp1, HP), "w1r": _pad2(w1r, fp1, HP),
        "b1": _pad2(b1, 1, HP),
        "w2l": _pad2(w2l, HP, HP), "w2r": _pad2(w2r, HP, HP),
        "b2": _pad2(b2, 1, HP),
        "wp": _pad2(raw["wp"], HP, HP), "bp": _pad2(raw["bp"], 1, HP),
    }


if __name__ == "__main__":
    key = jax.random.PRNGKey(0)
    k_x, k_e, k_l, k_p = jax.random.split(key, 4)

    num_nodes, in_feat, num_edges, num_sup = 16, 16, 24, 8

    x = jax.random.normal(k_x, (num_nodes, in_feat), jnp.float32)
    edge_index = jax.random.randint(k_e, (2, num_edges), 0, num_nodes,
                                    dtype=jnp.int32)
    edge_label_index = jax.random.randint(k_l, (2, num_sup), 0, num_nodes,
                                          dtype=jnp.int32)

    params = prepare_params(init_params(k_p, in_feat), in_feat)

    x_dict = {"n": x}
    edge_index_dict = {EDGE_TYPE: edge_index}
    edge_label_index_dict = {EDGE_TYPE: edge_label_index}

    pred = model_forward(x_dict, edge_index_dict, edge_label_index_dict, params)
    pred_t = jax.block_until_ready(pred[EDGE_TYPE])

    assert pred_t.shape == (num_sup,)
    assert bool(jnp.all(jnp.isfinite(pred_t)))
    assert bool(jnp.all((pred_t >= 0.0) & (pred_t <= 1.0)))
    print("KERNEL_OK")
</pallas_src>

<mosaic_0001>
module attributes {stable_mosaic.version = 11 : i64} {
  func.func @sage_layer_kernel(%arg0: i32, %arg1: i32, %arg2: memref<256x256xbf16, #tpu.memory_space<vmem>>, %arg3: memref<256x128xbf16, #tpu.memory_space<vmem>>, %arg4: memref<256x128xf32, #tpu.memory_space<vmem>>, %arg5: memref<128x128xf32, #tpu.memory_space<vmem>>, %arg6: memref<128x128xf32, #tpu.memory_space<vmem>>, %arg7: memref<1x128xf32, #tpu.memory_space<vmem>>, %arg8: memref<256x128xf32, #tpu.memory_space<vmem>>, %arg9: memref<256x128xbf16, #tpu.memory_space<vmem>>, %arg10: memref<256x128xf32, #tpu.memory_space<vmem>>) attributes {dimension_semantics = [#tpu.dimension_semantics<parallel>, #tpu.dimension_semantics<arbitrary>], iteration_bounds = array<i64: 1, 1>, scalar_prefetch = 0 : i64, scratch_operands = 1 : i64, tpu.core_type = #tpu.core_type<tc>, window_params = [{transform_indices = @transform_0, window_bounds = array<i64: 256, 256>}, {transform_indices = @transform_1, window_bounds = array<i64: 256, 128>}, {transform_indices = @transform_2, window_bounds = array<i64: 256, 128>}, {pipeline_mode = #tpu.pipeline_mode<synchronous>, transform_indices = @transform_3, window_bounds = array<i64: 128, 128>}, {pipeline_mode = #tpu.pipeline_mode<synchronous>, transform_indices = @transform_4, window_bounds = array<i64: 128, 128>}, {pipeline_mode = #tpu.pipeline_mode<synchronous>, transform_indices = @transform_5, window_bounds = array<i64: 1, 128>}, {transform_indices = @transform_6, window_bounds = array<i64: 256, 128>}, {transform_indices = @transform_7, window_bounds = array<i64: 256, 128>}]} {
    %c0_i32 = arith.constant 0 : i32
    %0 = arith.cmpi eq, %arg1, %c0_i32 : i32
    %1 = arith.extui %0 : i1 to i32
    %c0_i32_0 = arith.constant 0 : i32
    %2 = arith.cmpi ne, %1, %c0_i32_0 : i32
    scf.if %2 {
      %cst_10 = arith.constant 0.000000e+00 : f32
      %12 = vector.broadcast %cst_10 : f32 to vector<256x128xf32>
      %c0_11 = arith.constant 0 : index
      %c0_12 = arith.constant 0 : index
      %13 = vector.load %arg10[%c0_11, %c0_12] : memref<256x128xf32, #tpu.memory_space<vmem>>, vector<256x128xf32>
      tpu.vector_store %arg10[%c0_11, %c0_12], %12 {strides = array<i32>} : memref<256x128xf32, #tpu.memory_space<vmem>>, vector<256x128xf32>,
    } else {
    }
    %c0 = arith.constant 0 : index
    %c0_1 = arith.constant 0 : index
    %3 = vector.load %arg10[%c0, %c0_1] : memref<256x128xf32, #tpu.memory_space<vmem>>, vector<256x128xf32>
    %c0_2 = arith.constant 0 : index
    %c0_3 = arith.constant 0 : index
    %4 = vector.load %arg2[%c0_2, %c0_3] : memref<256x256xbf16, #tpu.memory_space<vmem>>, vector<256x256xbf16>
    %c0_4 = arith.constant 0 : index
    %c0_5 = arith.constant 0 : index
    %5 = vector.load %arg3[%c0_4, %c0_5] : memref<256x128xbf16, #tpu.memory_space<vmem>>, vector<256x128xbf16>
    %cst = arith.constant dense<0.000000e+00> : vector<256x128xf32>
    %6 = tpu.matmul %4, %5, %cst {dimension_numbers = #tpu.dot_dimension_numbers<[1], [0], [0], [1], [0, 0, 1, 1], [], []>} : vector<256x256xbf16>, vector<256x128xbf16>, vector<256x128xf32> -> vector<256x128xf32>
    %7 = arith.addf %3, %6 : vector<256x128xf32>
    %c0_6 = arith.constant 0 : index
    %c0_7 = arith.constant 0 : index
    %8 = vector.load %arg10[%c0_6, %c0_7] : memref<256x128xf32, #tpu.memory_space<vmem>>, vector<256x128xf32>
    tpu.vector_store %arg10[%c0_6, %c0_7], %7 {strides = array<i32>} : memref<256x128xf32, #tpu.memory_space<vmem>>, vector<256x128xf32>,
    %c0_i32_8 = arith.constant 0 : i32
    %9 = arith.cmpi eq, %arg1, %c0_i32_8 : i32
    %10 = arith.extui %9 : i1 to i32
    %c0_i32_9 = arith.constant 0 : i32
    %11 = arith.cmpi ne, %10, %c0_i32_9 : i32
    scf.if %11 {
      %c0_10 = arith.constant 0 : index
      %c0_11 = arith.constant 0 : index
      %12 = vector.load %arg10[%c0_10, %c0_11] : memref<256x128xf32, #tpu.memory_space<vmem>>, vector<256x128xf32>
      %c0_12 = arith.constant 0 : index
      %c0_13 = arith.constant 0 : index
      %13 = vector.load %arg5[%c0_12, %c0_13] : memref<128x128xf32, #tpu.memory_space<vmem>>, vector<128x128xf32>
      %cst_14 = arith.constant dense<0.000000e+00> : vector<256x128xf32>
      %14 = tpu.matmul %12, %13, %cst_14 {dimension_numbers = #tpu.dot_dimension_numbers<[1], [0], [0], [1], [0, 0, 1, 1], [], []>} : vector<256x128xf32>, vector<128x128xf32>, vector<256x128xf32> -> vector<256x128xf32>
      %c0_15 = arith.constant 0 : index
      %c0_16 = arith.constant 0 : index
      %15 = vector.load %arg4[%c0_15, %c0_16] : memref<256x128xf32, #tpu.memory_space<vmem>>, vector<256x128xf32>
      %c0_17 = arith.constant 0 : index
      %c0_18 = arith.constant 0 : index
      %16 = vector.load %arg6[%c0_17, %c0_18] : memref<128x128xf32, #tpu.memory_space<vmem>>, vector<128x128xf32>
      %cst_19 = arith.constant dense<0.000000e+00> : vector<256x128xf32>
      %17 = tpu.matmul %15, %16, %cst_19 {dimension_numbers = #tpu.dot_dimension_numbers<[1], [0], [0], [1], [0, 0, 1, 1], [], []>} : vector<256x128xf32>, vector<128x128xf32>, vector<256x128xf32> -> vector<256x128xf32>
      %18 = arith.addf %14, %17 : vector<256x128xf32>
      %c0_20 = arith.constant 0 : index
      %c0_21 = arith.constant 0 : index
      %19 = vector.load %arg7[%c0_20, %c0_21] : memref<1x128xf32, #tpu.memory_space<vmem>>, vector<1x128xf32>
      %20 = vector.broadcast %19 : vector<1x128xf32> to vector<256x128xf32>
      %21 = arith.addf %18, %20 : vector<256x128xf32>
      %cst_22 = arith.constant 0.000000e+00 : f32
      %22 = vector.broadcast %cst_22 : f32 to vector<256x128xf32>
      %23 = arith.cmpf oge, %21, %22 : vector<256x128xf32>
      %cst_23 = arith.constant 0.00999999977 : f32
      %24 = vector.broadcast %cst_23 : f32 to vector<256x128xf32>
      %25 = arith.mulf %24, %21 : vector<256x128xf32>
      %26 = arith.select %23, %21, %25 : vector<256x128xi1>, vector<256x128xf32>
      %27 = arith.mulf %26, %26 : vector<256x128xf32>
      %cst_24 = arith.constant dense<0.000000e+00> : vector<256xf32>
      %28 = vector.multi_reduction <add>, %27, %cst_24 [1] : vector<256x128xf32> to vector<256xf32>
      %29 = vector.shape_cast %28 : vector<256xf32> to vector<256x1xf32>
      %cst_25 = arith.constant 1.000000e-24 : f32
      %30 = vector.broadcast %cst_25 : f32 to vector<256x1xf32>
      %31 = arith.maximumf %29, %30 : vector<256x1xf32>
      %32 = math.rsqrt %31 : vector<256x1xf32>
      %33 = vector.broadcast %32 : vector<256x1xf32> to vector<256x128xf32>
      %34 = arith.mulf %26, %33 : vector<256x128xf32>
      %c0_26 = arith.constant 0 : index
      %c0_27 = arith.constant 0 : index
      %35 = vector.load %arg8[%c0_26, %c0_27] : memref<256x128xf32, #tpu.memory_space<vmem>>, vector<256x128xf32>
      tpu.vector_store %arg8[%c0_26, %c0_27], %34 {strides = array<i32>} : memref<256x128xf32, #tpu.memory_space<vmem>>, vector<256x128xf32>,
      %36 = arith.truncf %34 : vector<256x128xf32> to vector<256x128xbf16>
      %c0_28 = arith.constant 0 : index
      %c0_29 = arith.constant 0 : index
      %37 = vector.load %arg9[%c0_28, %c0_29] : memref<256x128xbf16, #tpu.memory_space<vmem>>, vector<256x128xbf16>
      tpu.vector_store %arg9[%c0_28, %c0_29], %36 {strides = array<i32>} : memref<256x128xbf16, #tpu.memory_space<vmem>>, vector<256x128xbf16>,
    } else {
    }
    return
  }
  func.func @transform_0(%arg0: i32, %arg1: i32) -> (i32, i32) {
    %c0_i32 = arith.constant 0 : i32
    return %arg0, %arg1 : i32, i32
  }
  func.func @transform_1(%arg0: i32, %arg1: i32) -> (i32, i32) {
    %c0_i32 = arith.constant 0 : i32
    %c0_i32_0 = arith.constant 0 : i32
    return %arg1, %c0_i32 : i32, i32
  }
  func.func @transform_2(%arg0: i32, %arg1: i32) -> (i32, i32) {
    %c0_i32 = arith.constant 0 : i32
    %c0_i32_0 = arith.constant 0 : i32
    return %arg0, %c0_i32 : i32, i32
  }
  func.func @transform_3(%arg0: i32, %arg1: i32) -> (i32, i32) {
    %c0_i32 = arith.constant 0 : i32
    %c0_i32_0 = arith.constant 0 : i32
    %c0_i32_1 = arith.constant 0 : i32
    return %c0_i32, %c0_i32_0 : i32, i32
  }
  func.func @transform_4(%arg0: i32, %arg1: i32) -> (i32, i32) {
    %c0_i32 = arith.constant 0 : i32
    %c0_i32_0 = arith.constant 0 : i32
    %c0_i32_1 = arith.constant 0 : i32
    return %c0_i32, %c0_i32_0 : i32, i32
  }
  func.func @transform_5(%arg0: i32, %arg1: i32) -> (i32, i32) {
    %c0_i32 = arith.constant 0 : i32
    %c0_i32_0 = arith.constant 0 : i32
    %c0_i32_1 = arith.constant 0 : i32
    return %c0_i32, %c0_i32_0 : i32, i32
  }
  func.func @transform_6(%arg0: i32, %arg1: i32) -> (i32, i32) {
    %c0_i32 = arith.constant 0 : i32
    %c0_i32_0 = arith.constant 0 : i32
    return %arg0, %c0_i32 : i32, i32
  }
  func.func @transform_7(%arg0: i32, %arg1: i32) -> (i32, i32) {
    %c0_i32 = arith.constant 0 : i32
    %c0_i32_0 = arith.constant 0 : i32
    return %arg0, %c0_i32 : i32, i32
  }
}

</mosaic_0001>

<llo_original>
// kernel: tpu_custom_call.1
$region0: #{tpu_custom_call.1}
  #allocation0 [shape = 'u32[]', space=smem, size = 0x4, offset = 0x4, fixed_abs, tag = 'smem constant byte address 0x4 - core index']
  #allocation1 [shape = 'u32[144,128]{1,0:T(1,128)}', space=vmem, size = 0x12000, scoped, tag = 'internal scratch']
  #allocation2 [shape = 'f32[256,128]{1,0:T(8,128)}', space=vmem, size = 0x20000, scoped, tag = 'scratch operand']
  %s0 = inlined_call_operand.hbm [shape: bf16[256,256], index: 0, kind: input, shape index: {}]
  %s1 = inlined_call_operand.hbm [shape: bf16[256,128], index: 1, kind: input, shape index: {}]
  %s2 = inlined_call_operand.hbm [shape: f32[256,128], index: 2, kind: input, shape index: {}]
  %s3 = inlined_call_operand.hbm [shape: f32[128,128], index: 3, kind: input, shape index: {}]
  %s4 = inlined_call_operand.hbm [shape: f32[128,128], index: 4, kind: input, shape index: {}]
  %s5 = inlined_call_operand.vmem [shape: f32[1,128], index: 5, kind: input, shape index: {}]
  %s6 = inlined_call_operand.hbm [shape: f32[256,128], index: 6, kind: output, shape index: {0}]
  %s7 = inlined_call_operand.hbm [shape: bf16[256,128], index: 7, kind: output, shape index: {1}]
  %8 = xla_tuple %s6, %s7
  %s9 = sld [smem:[#allocation0]]
  $region70: #{tpu_custom_call.1} parent=0
    _
  %s11 = ssub.s32 1, %s9
  %s12 = scalar_select 0, %s11, %s9
  $region1: #{tpu_custom_call.1} parent=0
    #allocation3 [shape = 'u8[131072]{0}', space=vmem, size = 0x20000, scoped, tag = 'input window, operand 0, single buffered']
    #allocation4 [shape = 's32[1]{0}', space=sflag, size = 0x4, scoped, tag = 'scoped memory for tpu_custom_call.1']
    #allocation5 [shape = 's32[1]{0}', space=sflag, size = 0x4, scoped, tag = 'scoped memory for tpu_custom_call.1']
    #allocation6 [shape = 'u8[65536]{0}', space=vmem, size = 0x10000, scoped, tag = 'input window, operand 1, single buffered']
    #allocation7 [shape = 's32[1]{0}', space=sflag, size = 0x4, scoped, tag = 'scoped memory for tpu_custom_call.1']
    #allocation8 [shape = 'u8[131072]{0}', space=vmem, size = 0x20000, scoped, tag = 'input window, operand 2, single buffered']
    #allocation9 [shape = 'u8[65536]{0}', space=vmem, size = 0x10000, scoped, tag = 'input window, operand 3, single buffered']
    #allocation10 [shape = 's32[1]{0}', space=sflag, size = 0x4, scoped, tag = 'scoped memory for tpu_custom_call.1']
    #allocation11 [shape = 'u8[65536]{0}', space=vmem, size = 0x10000, scoped, tag = 'input window, operand 4, single buffered']
    #allocation12 [shape = 'u8[131072]{0}', space=vmem, size = 0x20000, scoped, tag = 'output window, operand 0, single buffered']
    #allocation13 [shape = 'u8[65536]{0}', space=vmem, size = 0x10000, scoped, tag = 'output window, operand 1, single buffered']
    #allocation14 [shape = 's32[1]{0}', space=sflag, size = 0x4, scoped, tag = 'scoped memory for tpu_custom_call.1']
    %13 = vsyncpa [#allocation4], 0
    %14 = vsyncpa [#allocation7], 0
    %15 = vsyncpa [#allocation10], 0
    %16 = vsyncpa [#allocation5], 0
    %17 = vsyncpa [#allocation14], 0
    // Predicated region
    $region2: #{tpu_custom_call.1} parent=1 // pred_check
      _
    $region3: #{tpu_custom_call.1} parent=1 // pred_check_branch
      %19 = sbr.rel (0) target = $region5
    $region4: #{tpu_custom_call.1} parent=1 // pred_region
      %s21 = ssub.s32 4096, 4096
      %22 = vsyncadd [#allocation4], %s21
      %s23 = sshll.u32 [#allocation3], 4
      %s24 = int_to_ptr.vmem [resolvable:$true] %s23
      %29 = dma.hbm_to_vmem [thread:$0]  %s0, 4096, %s24, [#allocation4], 128, 128, 8
    $region5: #{tpu_custom_call.1} parent=1 // pred_fallthru
      _
    // Predicated region
    $region6: #{tpu_custom_call.1} parent=1 // pred_check
      _
    $region7: #{tpu_custom_call.1} parent=1 // pred_check_branch
      %31 = sbr.rel (0) target = $region9
    $region8: #{tpu_custom_call.1} parent=1 // pred_region
      %s33 = ssub.s32 2048, 2048
      %34 = vsyncadd [#allocation7], %s33
      %s35 = sshll.u32 [#allocation6], 4
      %s36 = int_to_ptr.vmem [resolvable:$true] %s35
      %41 = dma.hbm_to_vmem [thread:$0]  %s1, 2048, %s36, [#allocation7], 64, 64, 4
    $region9: #{tpu_custom_call.1} parent=1 // pred_fallthru
      _
    // Predicated region
    $region10: #{tpu_custom_call.1} parent=1 // pred_check
      _
    $region11: #{tpu_custom_call.1} parent=1 // pred_check_branch
      %43 = sbr.rel (0) target = $region13
    $region12: #{tpu_custom_call.1} parent=1 // pred_region
      %s45 = ssub.s32 4096, 4096
      %46 = vsyncadd [#allocation7], %s45
      %s47 = sshll.u32 [#allocation8], 4
      %s48 = int_to_ptr.vmem [resolvable:$true] %s47
      %53 = dma.hbm_to_vmem [thread:$0]  %s2, 4096, %s48, [#allocation7], 128, 128, 8
    $region13: #{tpu_custom_call.1} parent=1 // pred_fallthru
      _
    // Predicated region
    $region14: #{tpu_custom_call.1} parent=1 // pred_check
      _
    $region15: #{tpu_custom_call.1} parent=1 // pred_check_branch
      %55 = sbr.rel (0) target = $region17
    $region16: #{tpu_custom_call.1} parent=1 // pred_region
      %s57 = ssub.s32 2048, 2048
      %58 = vsyncadd [#allocation10], %s57
      %s59 = sshll.u32 [#allocation9], 4
      %s60 = int_to_ptr.vmem [resolvable:$true] %s59
      %65 = dma.hbm_to_vmem [thread:$0]  %s3, 2048, %s60, [#allocation10], 128, 128, 8
    $region17: #{tpu_custom_call.1} parent=1 // pred_fallthru
      _
    // Predicated region
    $region18: #{tpu_custom_call.1} parent=1 // pred_check
      _
    $region19: #{tpu_custom_call.1} parent=1 // pred_check_branch
      %67 = sbr.rel (0) target = $region21
    $region20: #{tpu_custom_call.1} parent=1 // pred_region
      %s69 = ssub.s32 2048, 2048
      %70 = vsyncadd [#allocation10], %s69
      %s71 = sshll.u32 [#allocation11], 4
      %s72 = int_to_ptr.vmem [resolvable:$true] %s71
      %77 = dma.hbm_to_vmem [thread:$0]  %s4, 2048, %s72, [#allocation10], 128, 128, 8
    $region21: #{tpu_custom_call.1} parent=1 // pred_fallthru
      _
    // Predicated region
    $region22: #{tpu_custom_call.1} parent=1 // pred_check
      _
    $region23: #{tpu_custom_call.1} parent=1 // pred_check_branch
      %79 = sbr.rel (0) target = $region25
    $region24: #{tpu_custom_call.1} parent=1 // pred_region
      _
    $region25: #{tpu_custom_call.1} parent=1 // pred_fallthru
      _
    // Predicated region
    $region26: #{tpu_custom_call.1} parent=1 // pred_check
      _
    $region27: #{tpu_custom_call.1} parent=1 // pred_check_branch
      %81 = sbr.rel (0) target = $region29
    $region28: #{tpu_custom_call.1} parent=1 // pred_region
      %82 = dma.done [#allocation4], 4096
    $region29: #{tpu_custom_call.1} parent=1 // pred_fallthru
      _
    // Predicated region
    $region30: #{tpu_custom_call.1} parent=1 // pred_check
      _
    $region31: #{tpu_custom_call.1} parent=1 // pred_check_branch
      %84 = sbr.rel (0) target = $region33
    $region32: #{tpu_custom_call.1} parent=1 // pred_region
      %85 = dma.done [#allocation7], 2048
    $region33: #{tpu_custom_call.1} parent=1 // pred_fallthru
      _
    // Predicated region
    $region34: #{tpu_custom_call.1} parent=1 // pred_check
      _
    $region35: #{tpu_custom_call.1} parent=1 // pred_check_branch
      %87 = sbr.rel (0) target = $region37
    $region36: #{tpu_custom_call.1} parent=1 // pred_region
      %88 = dma.done [#allocation7], 4096
    $region37: #{tpu_custom_call.1} parent=1 // pred_fallthru
      _
    // Predicated region
    $region38: #{tpu_custom_call.1} parent=1 // pred_check
      _
    $region39: #{tpu_custom_call.1} parent=1 // pred_check_branch
      %90 = sbr.rel (0) target = $region41
    $region40: #{tpu_custom_call.1} parent=1 // pred_region
      %91 = dma.done [#allocation10], 2048
    $region41: #{tpu_custom_call.1} parent=1 // pred_fallthru
      _
    // Predicated region
    $region42: #{tpu_custom_call.1} parent=1 // pred_check
      _
    $region43: #{tpu_custom_call.1} parent=1 // pred_check_branch
      %93 = sbr.rel (0) target = $region45
    $region44: #{tpu_custom_call.1} parent=1 // pred_region
      %94 = dma.done [#allocation10], 2048
    $region45: #{tpu_custom_call.1} parent=1 // pred_fallthru
      _
    %p96 = scmp.eq.s32.totalorder 0, 0
    // Predicated region
    $region46: #{tpu_custom_call.1} parent=1 // pred_check
      %p97 = pneg %p96
    $region47: #{tpu_custom_call.1} parent=1 // pred_check_branch
      %99 = sbr.rel (%p97) target = $region49
    $region48: #{tpu_custom_call.1} parent=1 // pred_region
      %100 = vst [vmem:[#allocation2] sm:$0xff] 0.0
      %101 = vst [vmem:[#allocation2 + $0x8] sm:$0xff] 0.0
      %102 = vst [vmem:[#allocation2 + $0x10] sm:$0xff] 0.0
      %103 = vst [vmem:[#allocation2 + $0x18] sm:$0xff] 0.0
      %104 = vst [vmem:[#allocation2 + $0x20] sm:$0xff] 0.0
      %105 = vst [vmem:[#allocation2 + $0x28] sm:$0xff] 0.0
      %106 = vst [vmem:[#allocation2 + $0x30] sm:$0xff] 0.0
      %107 = vst [vmem:[#allocation2 + $0x38] sm:$0xff] 0.0
      %108 = vst [vmem:[#allocation2 + $0x40] sm:$0xff] 0.0
      %109 = vst [vmem:[#allocation2 + $0x48] sm:$0xff] 0.0
      %110 = vst [vmem:[#allocation2 + $0x50] sm:$0xff] 0.0
      %111 = vst [vmem:[#allocation2 + $0x58] sm:$0xff] 0.0
      %112 = vst [vmem:[#allocation2 + $0x60] sm:$0xff] 0.0
      %113 = vst [vmem:[#allocation2 + $0x68] sm:$0xff] 0.0
      %114 = vst [vmem:[#allocation2 + $0x70] sm:$0xff] 0.0
      %115 = vst [vmem:[#allocation2 + $0x78] sm:$0xff] 0.0
      %116 = vst [vmem:[#allocation2 + $0x80] sm:$0xff] 0.0
      %117 = vst [vmem:[#allocation2 + $0x88] sm:$0xff] 0.0
      %118 = vst [vmem:[#allocation2 + $0x90] sm:$0xff] 0.0
      %119 = vst [vmem:[#allocation2 + $0x98] sm:$0xff] 0.0
      %120 = vst [vmem:[#allocation2 + $0xa0] sm:$0xff] 0.0
      %121 = vst [vmem:[#allocation2 + $0xa8] sm:$0xff] 0.0
      %122 = vst [vmem:[#allocation2 + $0xb0] sm:$0xff] 0.0
      %123 = vst [vmem:[#allocation2 + $0xb8] sm:$0xff] 0.0
      %124 = vst [vmem:[#allocation2 + $0xc0] sm:$0xff] 0.0
      %125 = vst [vmem:[#allocation2 + $0xc8] sm:$0xff] 0.0
      %126 = vst [vmem:[#allocation2 + $0xd0] sm:$0xff] 0.0
      %127 = vst [vmem:[#allocation2 + $0xd8] sm:$0xff] 0.0
      %128 = vst [vmem:[#allocation2 + $0xe0] sm:$0xff] 0.0
      %129 = vst [vmem:[#allocation2 + $0xe8] sm:$0xff] 0.0
      %130 = vst [vmem:[#allocation2 + $0xf0] sm:$0xff] 0.0
      %131 = vst [vmem:[#allocation2 + $0xf8] sm:$0xff] 0.0
    $region49: #{tpu_custom_call.1} parent=1 // pred_fallthru
      _
    %v132 = vld [vmem:[#allocation2] sm:$0xff]
    %v133 = vld [vmem:[#allocation2 + $0x8] sm:$0xff]
    %v134 = vld [vmem:[#allocation2 + $0x10] sm:$0xff]
    %v135 = vld [vmem:[#allocation2 + $0x18] sm:$0xff]
    %v136 = vld [vmem:[#allocation2 + $0x20] sm:$0xff]
    %v137 = vld [vmem:[#allocation2 + $0x28] sm:$0xff]
    %v138 = vld [vmem:[#allocation2 + $0x30] sm:$0xff]
    %v139 = vld [vmem:[#allocation2 + $0x38] sm:$0xff]
    %v140 = vld [vmem:[#allocation2 + $0x40] sm:$0xff]
    %v141 = vld [vmem:[#allocation2 + $0x48] sm:$0xff]
    %v142 = vld [vmem:[#allocation2 + $0x50] sm:$0xff]
    %v143 = vld [vmem:[#allocation2 + $0x58] sm:$0xff]
    %v144 = vld [vmem:[#allocation2 + $0x60] sm:$0xff]
    %v145 = vld [vmem:[#allocation2 + $0x68] sm:$0xff]
    %v146 = vld [vmem:[#allocation2 + $0x70] sm:$0xff]
    %v147 = vld [vmem:[#allocation2 + $0x78] sm:$0xff]
    %v148 = vld [vmem:[#allocation2 + $0x80] sm:$0xff]
    %v149 = vld [vmem:[#allocation2 + $0x88] sm:$0xff]
    %v150 = vld [vmem:[#allocation2 + $0x90] sm:$0xff]
    %v151 = vld [vmem:[#allocation2 + $0x98] sm:$0xff]
    %v152 = vld [vmem:[#allocation2 + $0xa0] sm:$0xff]
    %v153 = vld [vmem:[#allocation2 + $0xa8] sm:$0xff]
    %v154 = vld [vmem:[#allocation2 + $0xb0] sm:$0xff]
    %v155 = vld [vmem:[#allocation2 + $0xb8] sm:$0xff]
    %v156 = vld [vmem:[#allocation2 + $0xc0] sm:$0xff]
    %v157 = vld [vmem:[#allocation2 + $0xc8] sm:$0xff]
    %v158 = vld [vmem:[#allocation2 + $0xd0] sm:$0xff]
    %v159 = vld [vmem:[#allocation2 + $0xd8] sm:$0xff]
    %v160 = vld [vmem:[#allocation2 + $0xe0] sm:$0xff]
    %v161 = vld [vmem:[#allocation2 + $0xe8] sm:$0xff]
    %v162 = vld [vmem:[#allocation2 + $0xf0] sm:$0xff]
    %v163 = vld [vmem:[#allocation2 + $0xf8] sm:$0xff]
    %v164 = vld [vmem:[#allocation3] sm:$0xff]
    %v165 = vld [vmem:[#allocation3 + $0x8] sm:$0xff]
    %v166 = vld [vmem:[#allocation3 + $0x10] sm:$0xff]
    %v167 = vld [vmem:[#allocation3 + $0x18] sm:$0xff]
    %v168 = vld [vmem:[#allocation3 + $0x20] sm:$0xff]
    %v169 = vld [vmem:[#allocation3 + $0x28] sm:$0xff]
    %v170 = vld [vmem:[#allocation3 + $0x30] sm:$0xff]
    %v171 = vld [vmem:[#allocation3 + $0x38] sm:$0xff]
    %v172 = vld [vmem:[#allocation3 + $0x40] sm:$0xff]
    %v173 = vld [vmem:[#allocation3 + $0x48] sm:$0xff]
    %v174 = vld [vmem:[#allocation3 + $0x50] sm:$0xff]
    %v175 = vld [vmem:[#allocation3 + $0x58] sm:$0xff]
    %v176 = vld [vmem:[#allocation3 + $0x60] sm:$0xff]
    %v177 = vld [vmem:[#allocation3 + $0x68] sm:$0xff]
    %v178 = vld [vmem:[#allocation3 + $0x70] sm:$0xff]
    %v179 = vld [vmem:[#allocation3 + $0x78] sm:$0xff]
    %v180 = vld [vmem:[#allocation3 + $0x80] sm:$0xff]
    %v181 = vld [vmem:[#allocation3 + $0x88] sm:$0xff]
    %v182 = vld [vmem:[#allocation3 + $0x90] sm:$0xff]
    %v183 = vld [vmem:[#allocation3 + $0x98] sm:$0xff]
    %v184 = vld [vmem:[#allocation3 + $0xa0] sm:$0xff]
    %v185 = vld [vmem:[#allocation3 + $0xa8] sm:$0xff]
    %v186 = vld [vmem:[#allocation3 + $0xb0] sm:$0xff]
    %v187 = vld [vmem:[#allocation3 + $0xb8] sm:$0xff]
    %v188 = vld [vmem:[#allocation3 + $0xc0] sm:$0xff]
    %v189 = vld [vmem:[#allocation3 + $0xc8] sm:$0xff]
    %v190 = vld [vmem:[#allocation3 + $0xd0] sm:$0xff]
    %v191 = vld [vmem:[#allocation3 + $0xd8] sm:$0xff]
    %v192 = vld [vmem:[#allocation3 + $0xe0] sm:$0xff]
    %v193 = vld [vmem:[#allocation3 + $0xe8] sm:$0xff]
    %v194 = vld [vmem:[#allocation3 + $0xf0] sm:$0xff]
    %v195 = vld [vmem:[#allocation3 + $0xf8] sm:$0xff]
    %v196 = vld [vmem:[#allocation6] sm:$0xf]
    %v197 = vld [vmem:[#allocation6 + $0x4] sm:$0xf]
    %v198 = vld [vmem:[#allocation6 + $0x8] sm:$0xf]
    %v199 = vld [vmem:[#allocation6 + $0xc] sm:$0xf]
    %v200 = vld [vmem:[#allocation6 + $0x10] sm:$0xf]
    %v201 = vld [vmem:[#allocation6 + $0x14] sm:$0xf]
    %v202 = vld [vmem:[#allocation6 + $0x18] sm:$0xf]
    %v203 = vld [vmem:[#allocation6 + $0x1c] sm:$0xf]
    %v204 = vld [vmem:[#allocation6 + $0x20] sm:$0xf]
    %v205 = vld [vmem:[#allocation6 + $0x24] sm:$0xf]
    %v206 = vld [vmem:[#allocation6 + $0x28] sm:$0xf]
    %v207 = vld [vmem:[#allocation6 + $0x2c] sm:$0xf]
    %v208 = vld [vmem:[#allocation6 + $0x30] sm:$0xf]
    %v209 = vld [vmem:[#allocation6 + $0x34] sm:$0xf]
    %v210 = vld [vmem:[#allocation6 + $0x38] sm:$0xf]
    %v211 = vld [vmem:[#allocation6 + $0x3c] sm:$0xf]
    %v212 = vld [vmem:[#allocation6 + $0x40] sm:$0xf]
    %v213 = vld [vmem:[#allocation6 + $0x44] sm:$0xf]
    %v214 = vld [vmem:[#allocation6 + $0x48] sm:$0xf]
    %v215 = vld [vmem:[#allocation6 + $0x4c] sm:$0xf]
    %v216 = vld [vmem:[#allocation6 + $0x50] sm:$0xf]
    %v217 = vld [vmem:[#allocation6 + $0x54] sm:$0xf]
    %v218 = vld [vmem:[#allocation6 + $0x58] sm:$0xf]
    %v219 = vld [vmem:[#allocation6 + $0x5c] sm:$0xf]
    %v220 = vld [vmem:[#allocation6 + $0x60] sm:$0xf]
    %v221 = vld [vmem:[#allocation6 + $0x64] sm:$0xf]
    %v222 = vld [vmem:[#allocation6 + $0x68] sm:$0xf]
    %v223 = vld [vmem:[#allocation6 + $0x6c] sm:$0xf]
    %v224 = vld [vmem:[#allocation6 + $0x70] sm:$0xf]
    %v225 = vld [vmem:[#allocation6 + $0x74] sm:$0xf]
    %v226 = vld [vmem:[#allocation6 + $0x78] sm:$0xf]
    %v227 = vld [vmem:[#allocation6 + $0x7c] sm:$0xf]
    %v260 = vunpack.c.l.b16 %v164
    %v261 = vunpack.c.h.b16 %v164
    %v262 = vunpack.c.l.b16 %v165
    %v263 = vunpack.c.h.b16 %v165
    %v264 = vunpack.c.l.b16 %v166
    %v265 = vunpack.c.h.b16 %v166
    %v266 = vunpack.c.l.b16 %v167
    %v267 = vunpack.c.h.b16 %v167
    %v268 = vunpack.c.l.b16 %v168
    %v269 = vunpack.c.h.b16 %v168
    %v270 = vunpack.c.l.b16 %v169
    %v271 = vunpack.c.h.b16 %v169
    %v272 = vunpack.c.l.b16 %v170
    %v273 = vunpack.c.h.b16 %v170
    %v274 = vunpack.c.l.b16 %v171
    %v275 = vunpack.c.h.b16 %v171
    %v276 = vunpack.c.l.b16 %v172
    %v277 = vunpack.c.h.b16 %v172
    %v278 = vunpack.c.l.b16 %v173
    %v279 = vunpack.c.h.b16 %v173
    %v280 = vunpack.c.l.b16 %v174
    %v281 = vunpack.c.h.b16 %v174
    %v282 = vunpack.c.l.b16 %v175
    %v283 = vunpack.c.h.b16 %v175
    %v284 = vunpack.c.l.b16 %v176
    %v285 = vunpack.c.h.b16 %v176
    %v286 = vunpack.c.l.b16 %v177
    %v287 = vunpack.c.h.b16 %v177
    %v288 = vunpack.c.l.b16 %v178
    %v289 = vunpack.c.h.b16 %v178
    %v290 = vunpack.c.l.b16 %v179
    %v291 = vunpack.c.h.b16 %v179
    %v292 = vunpack.c.l.b16 %v180
    %v293 = vunpack.c.h.b16 %v180
    %v294 = vunpack.c.l.b16 %v181
    %v295 = vunpack.c.h.b16 %v181
    %v296 = vunpack.c.l.b16 %v182
    %v297 = vunpack.c.h.b16 %v182
    %v298 = vunpack.c.l.b16 %v183
    %v299 = vunpack.c.h.b16 %v183
    %v300 = vunpack.c.l.b16 %v184
    %v301 = vunpack.c.h.b16 %v184
    %v302 = vunpack.c.l.b16 %v185
    %v303 = vunpack.c.h.b16 %v185
    %v304 = vunpack.c.l.b16 %v186
    %v305 = vunpack.c.h.b16 %v186
    %v306 = vunpack.c.l.b16 %v187
    %v307 = vunpack.c.h.b16 %v187
    %v308 = vunpack.c.l.b16 %v188
    %v309 = vunpack.c.h.b16 %v188
    %v310 = vunpack.c.l.b16 %v189
    %v311 = vunpack.c.h.b16 %v189
    %v312 = vunpack.c.l.b16 %v190
    %v313 = vunpack.c.h.b16 %v190
    %v314 = vunpack.c.l.b16 %v191
    %v315 = vunpack.c.h.b16 %v191
    %v316 = vunpack.c.l.b16 %v192
    %v317 = vunpack.c.h.b16 %v192
    %v318 = vunpack.c.l.b16 %v193
    %v319 = vunpack.c.h.b16 %v193
    %v320 = vunpack.c.l.b16 %v194
    %v321 = vunpack.c.h.b16 %v194
    %v322 = vunpack.c.l.b16 %v195
    %v323 = vunpack.c.h.b16 %v195
    %v324 = vpack.c.b16 %v262, %v260
    %v325 = vpack.c.b16 %v263, %v261
    %v326 = vpack.c.b16 %v266, %v264
    %v327 = vpack.c.b16 %v267, %v265
    %v328 = vpack.c.b16 %v270, %v268
    %v329 = vpack.c.b16 %v271, %v269
    %v330 = vpack.c.b16 %v274, %v272
    %v331 = vpack.c.b16 %v275, %v273
    %v332 = vpack.c.b16 %v278, %v276
    %v333 = vpack.c.b16 %v279, %v277
    %v334 = vpack.c.b16 %v282, %v280
    %v335 = vpack.c.b16 %v283, %v281
    %v336 = vpack.c.b16 %v286, %v284
    %v337 = vpack.c.b16 %v287, %v285
    %v338 = vpack.c.b16 %v290, %v288
    %v339 = vpack.c.b16 %v291, %v289
    %v340 = vpack.c.b16 %v294, %v292
    %v341 = vpack.c.b16 %v295, %v293
    %v342 = vpack.c.b16 %v298, %v296
    %v343 = vpack.c.b16 %v299, %v297
    %v344 = vpack.c.b16 %v302, %v300
    %v345 = vpack.c.b16 %v303, %v301
    %v346 = vpack.c.b16 %v306, %v304
    %v347 = vpack.c.b16 %v307, %v305
    %v348 = vpack.c.b16 %v310, %v308
    %v349 = vpack.c.b16 %v311, %v309
    %v350 = vpack.c.b16 %v314, %v312
    %v351 = vpack.c.b16 %v315, %v313
    %v352 = vpack.c.b16 %v318, %v316
    %v353 = vpack.c.b16 %v319, %v317
    %v354 = vpack.c.b16 %v322, %v320
    %v355 = vpack.c.b16 %v323, %v321
    %v420 = vunpack.c.l.b16 %v196
    %v421 = vunpack.c.l.b16 %v197
    %v422 = vunpack.c.l.b16 %v198
    %v423 = vunpack.c.l.b16 %v199
    %v424 = vunpack.c.l.b16 %v200
    %v425 = vunpack.c.l.b16 %v201
    %v426 = vunpack.c.l.b16 %v202
    %v427 = vunpack.c.l.b16 %v203
    %v428 = vunpack.c.l.b16 %v204
    %v429 = vunpack.c.l.b16 %v205
    %v430 = vunpack.c.l.b16 %v206
    %v431 = vunpack.c.l.b16 %v207
    %v432 = vunpack.c.l.b16 %v208
    %v433 = vunpack.c.l.b16 %v209
    %v434 = vunpack.c.l.b16 %v210
    %v435 = vunpack.c.l.b16 %v211
    %v436 = vunpack.c.l.b16 %v212
    %v437 = vunpack.c.l.b16 %v213
    %v438 = vunpack.c.l.b16 %v214
    %v439 = vunpack.c.l.b16 %v215
    %v440 = vunpack.c.l.b16 %v216
    %v441 = vunpack.c.l.b16 %v217
    %v442 = vunpack.c.l.b16 %v218
    %v443 = vunpack.c.l.b16 %v219
    %v444 = vunpack.c.l.b16 %v220
    %v445 = vunpack.c.l.b16 %v221
    %v446 = vunpack.c.l.b16 %v222
    %v447 = vunpack.c.l.b16 %v223
    %v448 = vunpack.c.l.b16 %v224
    %v449 = vunpack.c.l.b16 %v225
    %v450 = vunpack.c.l.b16 %v226
    %v451 = vunpack.c.l.b16 %v227
    %v452 = vpack.c.b16 %v421, %v420
    %v453 = vpack.c.b16 %v423, %v422
    %v454 = vpack.c.b16 %v425, %v424
    %v455 = vpack.c.b16 %v427, %v426
    %v456 = vpack.c.b16 %v429, %v428
    %v457 = vpack.c.b16 %v431, %v430
    %v458 = vpack.c.b16 %v433, %v432
    %v459 = vpack.c.b16 %v435, %v434
    %v460 = vpack.c.b16 %v437, %v436
    %v461 = vpack.c.b16 %v439, %v438
    %v462 = vpack.c.b16 %v441, %v440
    %v463 = vpack.c.b16 %v443, %v442
    %v464 = vpack.c.b16 %v445, %v444
    %v465 = vpack.c.b16 %v447, %v446
    %v466 = vpack.c.b16 %v449, %v448
    %v467 = vpack.c.b16 %v451, %v450
    %484 = vmatprep.subr.bf16.mxu0 0
    %485 = vmatpush1.bf16.msra.mxu0 %v452
    %486 = vmatprep.subr.bf16.mxu0 0
    %487 = vmatpush1.bf16.msra.mxu0 %v453
    %488 = vmatprep.subr.bf16.mxu0 0
    %489 = vmatpush1.bf16.msra.mxu0 %v454
    %490 = vmatprep.subr.bf16.mxu0 0
    %491 = vmatpush1.bf16.msra.mxu0 %v455
    %492 = vmatprep.subr.bf16.mxu0 0
    %493 = vmatpush1.bf16.msra.mxu0 %v456
    %494 = vmatprep.subr.bf16.mxu0 0
    %495 = vmatpush1.bf16.msra.mxu0 %v457
    %496 = vmatprep.subr.bf16.mxu0 0
    %497 = vmatpush1.bf16.msra.mxu0 %v458
    %498 = vmatprep.subr.bf16.mxu0 0
    %499 = vmatpush1.bf16.msra.mxu0 %v459
    %500 = vmatprep.subr.bf16.mxu0 0
    %501 = vmatpush1.bf16.msra.mxu0 %v460
    %502 = vmatprep.subr.bf16.mxu0 0
    %503 = vmatpush1.bf16.msra.mxu0 %v461
    %504 = vmatprep.subr.bf16.mxu0 0
    %505 = vmatpush1.bf16.msra.mxu0 %v462
    %506 = vmatprep.subr.bf16.mxu0 0
    %507 = vmatpush1.bf16.msra.mxu0 %v463
    %508 = vmatprep.subr.bf16.mxu0 0
    %509 = vmatpush1.bf16.msra.mxu0 %v464
    %510 = vmatprep.subr.bf16.mxu0 0
    %511 = vmatpush1.bf16.msra.mxu0 %v465
    %512 = vmatprep.subr.bf16.mxu0 0
    %513 = vmatpush1.bf16.msra.mxu0 %v466
    %514 = vmatprep.subr.bf16.mxu0 0
    %515 = vmatpush1.bf16.msra.mxu0 %v467
    %516 = vmatprep.mubr.bf16.mxu0 %v325
    %517 = vmatmul.mubr.bf16.gmra.mrb[0].mxu0 %v324
    %v518 = vpop.f32.mrb[0].mxu0
    %v519 = vadd.f32 0.0, %v518
    %v520 = vpop.f32.mrb[0].mxu0
    %v521 = vpop.f32.mrb[0].mxu0
    %v522 = vadd.f32 0.0, %v521
    %v523 = vpop.f32.mrb[0].mxu0
    %524 = vmatprep.mubr.bf16.mxu0 %v327
    %525 = vmatmul.mubr.bf16.gmra.mrb[0].mxu0 %v326
    %v526 = vpop.f32.mrb[0].mxu0
    %v527 = vadd.f32 0.0, %v526
    %v528 = vpop.f32.mrb[0].mxu0
    %v529 = vpop.f32.mrb[0].mxu0
    %v530 = vadd.f32 0.0, %v529
    %v531 = vpop.f32.mrb[0].mxu0
    %532 = vmatprep.mubr.bf16.mxu0 %v329
    %533 = vmatmul.mubr.bf16.gmra.mrb[0].mxu0 %v328
    %v534 = vpop.f32.mrb[0].mxu0
    %v535 = vadd.f32 0.0, %v534
    %v536 = vpop.f32.mrb[0].mxu0
    %v537 = vpop.f32.mrb[0].mxu0
    %v538 = vadd.f32 0.0, %v537
    %v539 = vpop.f32.mrb[0].mxu0
    %540 = vmatprep.mubr.bf16.mxu0 %v331
    %541 = vmatmul.mubr.bf16.gmra.mrb[0].mxu0 %v330
    %v542 = vpop.f32.mrb[0].mxu0
    %v543 = vadd.f32 0.0, %v542
    %v544 = vpop.f32.mrb[0].mxu0
    %v545 = vpop.f32.mrb[0].mxu0
    %v546 = vadd.f32 0.0, %v545
    %v547 = vpop.f32.mrb[0].mxu0
    %548 = vmatprep.mubr.bf16.mxu0 %v333
    %549 = vmatmul.mubr.bf16.gmra.mrb[0].mxu0 %v332
    %v550 = vpop.f32.mrb[0].mxu0
    %v551 = vadd.f32 0.0, %v550
    %v552 = vpop.f32.mrb[0].mxu0
    %v553 = vpop.f32.mrb[0].mxu0
    %v554 = vadd.f32 0.0, %v553
    %v555 = vpop.f32.mrb[0].mxu0
    %556 = vmatprep.mubr.bf16.mxu0 %v335
    %557 = vmatmul.mubr.bf16.gmra.mrb[0].mxu0 %v334
    %v558 = vpop.f32.mrb[0].mxu0
    %v559 = vadd.f32 0.0, %v558
    %v560 = vpop.f32.mrb[0].mxu0
    %v561 = vpop.f32.mrb[0].mxu0
    %v562 = vadd.f32 0.0, %v561
    %v563 = vpop.f32.mrb[0].mxu0
    %564 = vmatprep.mubr.bf16.mxu0 %v337
    %565 = vmatmul.mubr.bf16.gmra.mrb[0].mxu0 %v336
    %v566 = vpop.f32.mrb[0].mxu0
    %v567 = vadd.f32 0.0, %v566
    %v568 = vpop.f32.mrb[0].mxu0
    %v569 = vpop.f32.mrb[0].mxu0
    %v570 = vadd.f32 0.0, %v569
    %v571 = vpop.f32.mrb[0].mxu0
    %572 = vmatprep.mubr.bf16.mxu0 %v339
    %573 = vmatmul.mubr.bf16.gmra.mrb[0].mxu0 %v338
    %v574 = vpop.f32.mrb[0].mxu0
    %v575 = vadd.f32 0.0, %v574
    %v576 = vpop.f32.mrb[0].mxu0
    %v577 = vpop.f32.mrb[0].mxu0
    %v578 = vadd.f32 0.0, %v577
    %v579 = vpop.f32.mrb[0].mxu0
    %580 = vmatprep.mubr.bf16.mxu0 %v341
    %581 = vmatmul.mubr.bf16.gmra.mrb[0].mxu0 %v340
    %v582 = vpop.f32.mrb[0].mxu0
    %v583 = vadd.f32 0.0, %v582
    %v584 = vpop.f32.mrb[0].mxu0
    %v585 = vpop.f32.mrb[0].mxu0
    %v586 = vadd.f32 0.0, %v585
    %v587 = vpop.f32.mrb[0].mxu0
    %588 = vmatprep.mubr.bf16.mxu0 %v343
    %589 = vmatmul.mubr.bf16.gmra.mrb[0].mxu0 %v342
    %v590 = vpop.f32.mrb[0].mxu0
    %v591 = vadd.f32 0.0, %v590
    %v592 = vpop.f32.mrb[0].mxu0
    %v593 = vpop.f32.mrb[0].mxu0
    %v594 = vadd.f32 0.0, %v593
    %v595 = vpop.f32.mrb[0].mxu0
    %596 = vmatprep.mubr.bf16.mxu0 %v345
    %597 = vmatmul.mubr.bf16.gmra.mrb[0].mxu0 %v344
    %v598 = vpop.f32.mrb[0].mxu0
    %v599 = vadd.f32 0.0, %v598
    %v600 = vpop.f32.mrb[0].mxu0
    %v601 = vpop.f32.mrb[0].mxu0
    %v602 = vadd.f32 0.0, %v601
    %v603 = vpop.f32.mrb[0].mxu0
    %604 = vmatprep.mubr.bf16.mxu0 %v347
    %605 = vmatmul.mubr.bf16.gmra.mrb[0].mxu0 %v346
    %v606 = vpop.f32.mrb[0].mxu0
    %v607 = vadd.f32 0.0, %v606
    %v608 = vpop.f32.mrb[0].mxu0
    %v609 = vpop.f32.mrb[0].mxu0
    %v610 = vadd.f32 0.0, %v609
    %v611 = vpop.f32.mrb[0].mxu0
    %612 = vmatprep.mubr.bf16.mxu0 %v349
    %613 = vmatmul.mubr.bf16.gmra.mrb[0].mxu0 %v348
    %v614 = vpop.f32.mrb[0].mxu0
    %v615 = vadd.f32 0.0, %v614
    %v616 = vpop.f32.mrb[0].mxu0
    %v617 = vpop.f32.mrb[0].mxu0
    %v618 = vadd.f32 0.0, %v617
    %v619 = vpop.f32.mrb[0].mxu0
    %620 = vmatprep.mubr.bf16.mxu0 %v351
    %621 = vmatmul.mubr.bf16.gmra.mrb[0].mxu0 %v350
    %v622 = vpop.f32.mrb[0].mxu0
    %v623 = vadd.f32 0.0, %v622
    %v624 = vpop.f32.mrb[0].mxu0
    %v625 = vpop.f32.mrb[0].mxu0
    %v626 = vadd.f32 0.0, %v625
    %v627 = vpop.f32.mrb[0].mxu0
    %628 = vmatprep.mubr.bf16.mxu0 %v353
    %629 = vmatmul.mubr.bf16.gmra.mrb[0].mxu0 %v352
    %v630 = vpop.f32.mrb[0].mxu0
    %v631 = vadd.f32 0.0, %v630
    %v632 = vpop.f32.mrb[0].mxu0
    %v633 = vpop.f32.mrb[0].mxu0
    %v634 = vadd.f32 0.0, %v633
    %v635 = vpop.f32.mrb[0].mxu0
    %636 = vmatprep.mubr.bf16.mxu0 %v355
    %637 = vmatmul.mubr.bf16.gmra.mrb[0].mxu0 %v354
    %v638 = vpop.f32.mrb[0].mxu0
    %v639 = vadd.f32 0.0, %v638
    %v640 = vpop.f32.mrb[0].mxu0
    %v641 = vpop.f32.mrb[0].mxu0
    %v642 = vadd.f32 0.0, %v641
    %v643 = vpop.f32.mrb[0].mxu0
    %644 = vdwg.mxu0
    %v645 = vadd.f32 %v132, %v519
    %v646 = vadd.f32 %v133, %v522
    %v647 = vadd.f32 %v134, %v527
    %v648 = vadd.f32 %v135, %v530
    %v649 = vadd.f32 %v136, %v535
    %v650 = vadd.f32 %v137, %v538
    %v651 = vadd.f32 %v138, %v543
    %v652 = vadd.f32 %v139, %v546
    %v653 = vadd.f32 %v140, %v551
    %v654 = vadd.f32 %v141, %v554
    %v655 = vadd.f32 %v142, %v559
    %v656 = vadd.f32 %v143, %v562
    %v657 = vadd.f32 %v144, %v567
    %v658 = vadd.f32 %v145, %v570
    %v659 = vadd.f32 %v146, %v575
    %v660 = vadd.f32 %v147, %v578
    %v661 = vadd.f32 %v148, %v583
    %v662 = vadd.f32 %v149, %v586
    %v663 = vadd.f32 %v150, %v591
    %v664 = vadd.f32 %v151, %v594
    %v665 = vadd.f32 %v152, %v599
    %v666 = vadd.f32 %v153, %v602
    %v667 = vadd.f32 %v154, %v607
    %v668 = vadd.f32 %v155, %v610
    %v669 = vadd.f32 %v156, %v615
    %v670 = vadd.f32 %v157, %v618
    %v671 = vadd.f32 %v158, %v623
    %v672 = vadd.f32 %v159, %v626
    %v673 = vadd.f32 %v160, %v631
    %v674 = vadd.f32 %v161, %v634
    %v675 = vadd.f32 %v162, %v639
    %v676 = vadd.f32 %v163, %v642
    %677 = vst [vmem:[#allocation2] sm:$0xff] %v645
    %678 = vst [vmem:[#allocation2 + $0x8] sm:$0xff] %v646
    %679 = vst [vmem:[#allocation2 + $0x10] sm:$0xff] %v647
    %680 = vst [vmem:[#allocation2 + $0x18] sm:$0xff] %v648
    %681 = vst [vmem:[#allocation2 + $0x20] sm:$0xff] %v649
    %682 = vst [vmem:[#allocation2 + $0x28] sm:$0xff] %v650
    %683 = vst [vmem:[#allocation2 + $0x30] sm:$0xff] %v651
    %684 = vst [vmem:[#allocation2 + $0x38] sm:$0xff] %v652
    %685 = vst [vmem:[#allocation2 + $0x40] sm:$0xff] %v653
    %686 = vst [vmem:[#allocation2 + $0x48] sm:$0xff] %v654
    %687 = vst [vmem:[#allocation2 + $0x50] sm:$0xff] %v655
    %688 = vst [vmem:[#allocation2 + $0x58] sm:$0xff] %v656
    %689 = vst [vmem:[#allocation2 + $0x60] sm:$0xff] %v657
    %690 = vst [vmem:[#allocation2 + $0x68] sm:$0xff] %v658
    %691 = vst [vmem:[#allocation2 + $0x70] sm:$0xff] %v659
    %692 = vst [vmem:[#allocation2 + $0x78] sm:$0xff] %v660
    %693 = vst [vmem:[#allocation2 + $0x80] sm:$0xff] %v661
    %694 = vst [vmem:[#allocation2 + $0x88] sm:$0xff] %v662
    %695 = vst [vmem:[#allocation2 + $0x90] sm:$0xff] %v663
    %696 = vst [vmem:[#allocation2 + $0x98] sm:$0xff] %v664
    %697 = vst [vmem:[#allocation2 + $0xa0] sm:$0xff] %v665
    %698 = vst [vmem:[#allocation2 + $0xa8] sm:$0xff] %v666
    %699 = vst [vmem:[#allocation2 + $0xb0] sm:$0xff] %v667
    %700 = vst [vmem:[#allocation2 + $0xb8] sm:$0xff] %v668
    %701 = vst [vmem:[#allocation2 + $0xc0] sm:$0xff] %v669
    %702 = vst [vmem:[#allocation2 + $0xc8] sm:$0xff] %v670
    %703 = vst [vmem:[#allocation2 + $0xd0] sm:$0xff] %v671
    %704 = vst [vmem:[#allocation2 + $0xd8] sm:$0xff] %v672
    %705 = vst [vmem:[#allocation2 + $0xe0] sm:$0xff] %v673
    %706 = vst [vmem:[#allocation2 + $0xe8] sm:$0xff] %v674
    %707 = vst [vmem:[#allocation2 + $0xf0] sm:$0xff] %v675
    %708 = vst [vmem:[#allocation2 + $0xf8] sm:$0xff] %v676
    // Predicated region
    $region50: #{tpu_custom_call.1} parent=1 // pred_check
      %p709 = pneg %p96
    $region51: #{tpu_custom_call.1} parent=1 // pred_check_branch
      %711 = sbr.rel (%p709) target = $region53
    $region52: #{tpu_custom_call.1} parent=1 // pred_region
      %v712 = vld [vmem:[#allocation2] sm:$0xff]
      %v713 = vld [vmem:[#allocation2 + $0x8] sm:$0xff]
      %v714 = vld [vmem:[#allocation2 + $0x10] sm:$0xff]
      %v715 = vld [vmem:[#allocation2 + $0x18] sm:$0xff]
      %v716 = vld [vmem:[#allocation2 + $0x20] sm:$0xff]
      %v717 = vld [vmem:[#allocation2 + $0x28] sm:$0xff]
      %v718 = vld [vmem:[#allocation2 + $0x30] sm:$0xff]
      %v719 = vld [vmem:[#allocation2 + $0x38] sm:$0xff]
      %v720 = vld [vmem:[#allocation2 + $0x40] sm:$0xff]
      %v721 = vld [vmem:[#allocation2 + $0x48] sm:$0xff]
      %v722 = vld [vmem:[#allocation2 + $0x50] sm:$0xff]
      %v723 = vld [vmem:[#allocation2 + $0x58] sm:$0xff]
      %v724 = vld [vmem:[#allocation2 + $0x60] sm:$0xff]
      %v725 = vld [vmem:[#allocation2 + $0x68] sm:$0xff]
      %v726 = vld [vmem:[#allocation2 + $0x70] sm:$0xff]
      %v727 = vld [vmem:[#allocation2 + $0x78] sm:$0xff]
      %v728 = vld [vmem:[#allocation2 + $0x80] sm:$0xff]
      %v729 = vld [vmem:[#allocation2 + $0x88] sm:$0xff]
      %v730 = vld [vmem:[#allocation2 + $0x90] sm:$0xff]
      %v731 = vld [vmem:[#allocation2 + $0x98] sm:$0xff]
      %v732 = vld [vmem:[#allocation2 + $0xa0] sm:$0xff]
      %v733 = vld [vmem:[#allocation2 + $0xa8] sm:$0xff]
      %v734 = vld [vmem:[#allocation2 + $0xb0] sm:$0xff]
      %v735 = vld [vmem:[#allocation2 + $0xb8] sm:$0xff]
      %v736 = vld [vmem:[#allocation2 + $0xc0] sm:$0xff]
      %v737 = vld [vmem:[#allocation2 + $0xc8] sm:$0xff]
      %v738 = vld [vmem:[#allocation2 + $0xd0] sm:$0xff]
      %v739 = vld [vmem:[#allocation2 + $0xd8] sm:$0xff]
      %v740 = vld [vmem:[#allocation2 + $0xe0] sm:$0xff]
      %v741 = vld [vmem:[#allocation2 + $0xe8] sm:$0xff]
      %v742 = vld [vmem:[#allocation2 + $0xf0] sm:$0xff]
      %v743 = vld [vmem:[#allocation2 + $0xf8] sm:$0xff]
      %v744 = vld [vmem:[#allocation9] sm:$0xff]
      %v745 = vld [vmem:[#allocation9 + $0x8] sm:$0xff]
      %v746 = vld [vmem:[#allocation9 + $0x10] sm:$0xff]
      %v747 = vld [vmem:[#allocation9 + $0x18] sm:$0xff]
      %v748 = vld [vmem:[#allocation9 + $0x20] sm:$0xff]
      %v749 = vld [vmem:[#allocation9 + $0x28] sm:$0xff]
      %v750 = vld [vmem:[#allocation9 + $0x30] sm:$0xff]
      %v751 = vld [vmem:[#allocation9 + $0x38] sm:$0xff]
      %v752 = vld [vmem:[#allocation9 + $0x40] sm:$0xff]
      %v753 = vld [vmem:[#allocation9 + $0x48] sm:$0xff]
      %v754 = vld [vmem:[#allocation9 + $0x50] sm:$0xff]
      %v755 = vld [vmem:[#allocation9 + $0x58] sm:$0xff]
      %v756 = vld [vmem:[#allocation9 + $0x60] sm:$0xff]
      %v757 = vld [vmem:[#allocation9 + $0x68] sm:$0xff]
      %v758 = vld [vmem:[#allocation9 + $0x70] sm:$0xff]
      %v759 = vld [vmem:[#allocation9 + $0x78] sm:$0xff]
      %v760 = vld [vmem:[#allocation8] sm:$0xff]
      %v761 = vld [vmem:[#allocation8 + $0x8] sm:$0xff]
      %v762 = vld [vmem:[#allocation8 + $0x10] sm:$0xff]
      %v763 = vld [vmem:[#allocation8 + $0x18] sm:$0xff]
      %v764 = vld [vmem:[#allocation8 + $0x20] sm:$0xff]
      %v765 = vld [vmem:[#allocation8 + $0x28] sm:$0xff]
      %v766 = vld [vmem:[#allocation8 + $0x30] sm:$0xff]
      %v767 = vld [vmem:[#allocation8 + $0x38] sm:$0xff]
      %v768 = vld [vmem:[#allocation8 + $0x40] sm:$0xff]
      %v769 = vld [vmem:[#allocation8 + $0x48] sm:$0xff]
      %v770 = vld [vmem:[#allocation8 + $0x50] sm:$0xff]
      %v771 = vld [vmem:[#allocation8 + $0x58] sm:$0xff]
      %v772 = vld [vmem:[#allocation8 + $0x60] sm:$0xff]
      %v773 = vld [vmem:[#allocation8 + $0x68] sm:$0xff]
      %v774 = vld [vmem:[#allocation8 + $0x70] sm:$0xff]
      %v775 = vld [vmem:[#allocation8 + $0x78] sm:$0xff]
      %v776 = vld [vmem:[#allocation8 + $0x80] sm:$0xff]
      %v777 = vld [vmem:[#allocation8 + $0x88] sm:$0xff]
      %v778 = vld [vmem:[#allocation8 + $0x90] sm:$0xff]
      %v779 = vld [vmem:[#allocation8 + $0x98] sm:$0xff]
      %v780 = vld [vmem:[#allocation8 + $0xa0] sm:$0xff]
      %v781 = vld [vmem:[#allocation8 + $0xa8] sm:$0xff]
      %v782 = vld [vmem:[#allocation8 + $0xb0] sm:$0xff]
      %v783 = vld [vmem:[#allocation8 + $0xb8] sm:$0xff]
      %v784 = vld [vmem:[#allocation8 + $0xc0] sm:$0xff]
      %v785 = vld [vmem:[#allocation8 + $0xc8] sm:$0xff]
      %v786 = vld [vmem:[#allocation8 + $0xd0] sm:$0xff]
      %v787 = vld [vmem:[#allocation8 + $0xd8] sm:$0xff]
      %v788 = vld [vmem:[#allocation8 + $0xe0] sm:$0xff]
      %v789 = vld [vmem:[#allocation8 + $0xe8] sm:$0xff]
      %v790 = vld [vmem:[#allocation8 + $0xf0] sm:$0xff]
      %v791 = vld [vmem:[#allocation8 + $0xf8] sm:$0xff]
      %v792 = vld [vmem:[#allocation11] sm:$0xff]
      %v793 = vld [vmem:[#allocation11 + $0x8] sm:$0xff]
      %v794 = vld [vmem:[#allocation11 + $0x10] sm:$0xff]
      %v795 = vld [vmem:[#allocation11 + $0x18] sm:$0xff]
      %v796 = vld [vmem:[#allocation11 + $0x20] sm:$0xff]
      %v797 = vld [vmem:[#allocation11 + $0x28] sm:$0xff]
      %v798 = vld [vmem:[#allocation11 + $0x30] sm:$0xff]
      %v799 = vld [vmem:[#allocation11 + $0x38] sm:$0xff]
      %v800 = vld [vmem:[#allocation11 + $0x40] sm:$0xff]
      %v801 = vld [vmem:[#allocation11 + $0x48] sm:$0xff]
      %v802 = vld [vmem:[#allocation11 + $0x50] sm:$0xff]
      %v803 = vld [vmem:[#allocation11 + $0x58] sm:$0xff]
      %v804 = vld [vmem:[#allocation11 + $0x60] sm:$0xff]
      %v805 = vld [vmem:[#allocation11 + $0x68] sm:$0xff]
      %v806 = vld [vmem:[#allocation11 + $0x70] sm:$0xff]
      %v807 = vld [vmem:[#allocation11 + $0x78] sm:$0xff]
      %808 = vmatprep.subr.mxu0 0.0
      %809 = vmatpush1.msra.mxu0 %v792
      %810 = vmatprep.subr.mxu0 0.0
      %811 = vmatpush1.msra.mxu0 %v793
      %812 = vmatprep.subr.mxu0 0.0
      %813 = vmatpush1.msra.mxu0 %v794
      %814 = vmatprep.subr.mxu0 0.0
      %815 = vmatpush1.msra.mxu0 %v795
      %816 = vmatprep.subr.mxu0 0.0
      %817 = vmatpush1.msra.mxu0 %v796
      %818 = vmatprep.subr.mxu0 0.0
      %819 = vmatpush1.msra.mxu0 %v797
      %820 = vmatprep.subr.mxu0 0.0
      %821 = vmatpush1.msra.mxu0 %v798
      %822 = vmatprep.subr.mxu0 0.0
      %823 = vmatpush1.msra.mxu0 %v799
      %824 = vmatprep.subr.mxu0 0.0
      %825 = vmatpush1.msra.mxu0 %v800
      %826 = vmatprep.subr.mxu0 0.0
      %827 = vmatpush1.msra.mxu0 %v801
      %828 = vmatprep.subr.mxu0 0.0
      %829 = vmatpush1.msra.mxu0 %v802
      %830 = vmatprep.subr.mxu0 0.0
      %831 = vmatpush1.msra.mxu0 %v803
      %832 = vmatprep.subr.mxu0 0.0
      %833 = vmatpush1.msra.mxu0 %v804
      %834 = vmatprep.subr.mxu0 0.0
      %835 = vmatpush1.msra.mxu0 %v805
      %836 = vmatprep.subr.mxu0 0.0
      %837 = vmatpush1.msra.mxu0 %v806
      %838 = vmatprep.subr.mxu0 0.0
      %839 = vmatpush1.msra.mxu0 %v807
      %840 = vmatprep.subr.mxu0 0.0
      %841 = vmatpush1.msra.mxu0 0.0
      %842 = vmatprep.subr.mxu0 0.0
      %843 = vmatpush1.msra.mxu0 0.0
      %844 = vmatprep.subr.mxu0 0.0
      %845 = vmatpush1.msra.mxu0 0.0
      %846 = vmatprep.subr.mxu0 0.0
      %847 = vmatpush1.msra.mxu0 0.0
      %848 = vmatprep.subr.mxu0 0.0
      %849 = vmatpush1.msra.mxu0 0.0
      %850 = vmatprep.subr.mxu0 0.0
      %851 = vmatpush1.msra.mxu0 0.0
      %852 = vmatprep.subr.mxu0 0.0
      %853 = vmatpush1.msra.mxu0 0.0
      %854 = vmatprep.subr.mxu0 0.0
      %855 = vmatpush1.msra.mxu0 0.0
      %856 = vmatprep.subr.mxu0 0.0
      %857 = vmatpush1.msra.mxu0 0.0
      %858 = vmatprep.subr.mxu0 0.0
      %859 = vmatpush1.msra.mxu0 0.0
      %860 = vmatprep.subr.mxu0 0.0
      %861 = vmatpush1.msra.mxu0 0.0
      %862 = vmatprep.subr.mxu0 0.0
      %863 = vmatpush1.msra.mxu0 0.0
      %864 = vmatprep.subr.mxu0 0.0
      %865 = vmatpush1.msra.mxu0 0.0
      %866 = vmatprep.subr.mxu0 0.0
      %867 = vmatpush1.msra.mxu0 0.0
      %868 = vmatprep.subr.mxu0 0.0
      %869 = vmatpush1.msra.mxu0 0.0
      %870 = vmatprep.subr.mxu0 0.0
      %871 = vmatpush1.msra.mxu0 0.0
      %872 = vmatprep.mubr.f32.mxu0 0.0
      %873 = vmatmul.mubr.f32.gmra.mrb[0].mxu0 %v760
      %v874 = vpop.f32.mrb[0].mxu0
      %v875 = vadd.f32 0.0, %v874
      %v876 = vpop.f32.mrb[0].mxu0
      %877 = vmatprep.mubr.f32.mxu0 0.0
      %878 = vmatmul.mubr.f32.gmra.mrb[0].mxu0 %v761
      %v879 = vpop.f32.mrb[0].mxu0
      %v880 = vadd.f32 0.0, %v879
      %v881 = vpop.f32.mrb[0].mxu0
      %882 = vmatprep.mubr.f32.mxu0 0.0
      %883 = vmatmul.mubr.f32.gmra.mrb[0].mxu0 %v762
      %v884 = vpop.f32.mrb[0].mxu0
      %v885 = vadd.f32 0.0, %v884
      %v886 = vpop.f32.mrb[0].mxu0
      %887 = vmatprep.mubr.f32.mxu0 0.0
      %888 = vmatmul.mubr.f32.gmra.mrb[0].mxu0 %v763
      %v889 = vpop.f32.mrb[0].mxu0
      %v890 = vadd.f32 0.0, %v889
      %v891 = vpop.f32.mrb[0].mxu0
      %892 = vmatprep.mubr.f32.mxu0 0.0
      %893 = vmatmul.mubr.f32.gmra.mrb[0].mxu0 %v764
      %v894 = vpop.f32.mrb[0].mxu0
      %v895 = vadd.f32 0.0, %v894
      %v896 = vpop.f32.mrb[0].mxu0
      %897 = vmatprep.mubr.f32.mxu0 0.0
      %898 = vmatmul.mubr.f32.gmra.mrb[0].mxu0 %v765
      %v899 = vpop.f32.mrb[0].mxu0
      %v900 = vadd.f32 0.0, %v899
      %v901 = vpop.f32.mrb[0].mxu0
      %902 = vmatprep.mubr.f32.mxu0 0.0
      %903 = vmatmul.mubr.f32.gmra.mrb[0].mxu0 %v766
      %v904 = vpop.f32.mrb[0].mxu0
      %v905 = vadd.f32 0.0, %v904
      %v906 = vpop.f32.mrb[0].mxu0
      %907 = vmatprep.mubr.f32.mxu0 0.0
      %908 = vmatmul.mubr.f32.gmra.mrb[0].mxu0 %v767
      %v909 = vpop.f32.mrb[0].mxu0
      %v910 = vadd.f32 0.0, %v909
      %v911 = vpop.f32.mrb[0].mxu0
      %912 = vmatprep.mubr.f32.mxu0 0.0
      %913 = vmatmul.mubr.f32.gmra.mrb[0].mxu0 %v768
      %v914 = vpop.f32.mrb[0].mxu0
      %v915 = vadd.f32 0.0, %v914
      %v916 = vpop.f32.mrb[0].mxu0
      %917 = vmatprep.mubr.f32.mxu0 0.0
      %918 = vmatmul.mubr.f32.gmra.mrb[0].mxu0 %v769
      %v919 = vpop.f32.mrb[0].mxu0
      %v920 = vadd.f32 0.0, %v919
      %v921 = vpop.f32.mrb[0].mxu0
      %922 = vmatprep.mubr.f32.mxu0 0.0
      %923 = vmatmul.mubr.f32.gmra.mrb[0].mxu0 %v770
      %v924 = vpop.f32.mrb[0].mxu0
      %v925 = vadd.f32 0.0, %v924
      %v926 = vpop.f32.mrb[0].mxu0
      %927 = vmatprep.mubr.f32.mxu0 0.0
      %928 = vmatmul.mubr.f32.gmra.mrb[0].mxu0 %v771
      %v929 = vpop.f32.mrb[0].mxu0
      %v930 = vadd.f32 0.0, %v929
      %v931 = vpop.f32.mrb[0].mxu0
      %932 = vmatprep.mubr.f32.mxu0 0.0
      %933 = vmatmul.mubr.f32.gmra.mrb[0].mxu0 %v772
      %v934 = vpop.f32.mrb[0].mxu0
      %v935 = vadd.f32 0.0, %v934
      %v936 = vpop.f32.mrb[0].mxu0
      %937 = vmatprep.mubr.f32.mxu0 0.0
      %938 = vmatmul.mubr.f32.gmra.mrb[0].mxu0 %v773
      %v939 = vpop.f32.mrb[0].mxu0
      %v940 = vadd.f32 0.0, %v939
      %v941 = vpop.f32.mrb[0].mxu0
      %942 = vmatprep.mubr.f32.mxu0 0.0
      %943 = vmatmul.mubr.f32.gmra.mrb[0].mxu0 %v774
      %v944 = vpop.f32.mrb[0].mxu0
      %v945 = vadd.f32 0.0, %v944
      %v946 = vpop.f32.mrb[0].mxu0
      %947 = vmatprep.mubr.f32.mxu0 0.0
      %948 = vmatmul.mubr.f32.gmra.mrb[0].mxu0 %v775
      %v949 = vpop.f32.mrb[0].mxu0
      %v950 = vadd.f32 0.0, %v949
      %v951 = vpop.f32.mrb[0].mxu0
      %952 = vmatprep.mubr.f32.mxu0 0.0
      %953 = vmatmul.mubr.f32.gmra.mrb[0].mxu0 %v776
      %v954 = vpop.f32.mrb[0].mxu0
      %v955 = vadd.f32 0.0, %v954
      %v956 = vpop.f32.mrb[0].mxu0
      %957 = vmatprep.mubr.f32.mxu0 0.0
      %958 = vmatmul.mubr.f32.gmra.mrb[0].mxu0 %v777
      %v959 = vpop.f32.mrb[0].mxu0
      %v960 = vadd.f32 0.0, %v959
      %v961 = vpop.f32.mrb[0].mxu0
      %962 = vmatprep.mubr.f32.mxu0 0.0
      %963 = vmatmul.mubr.f32.gmra.mrb[0].mxu0 %v778
      %v964 = vpop.f32.mrb[0].mxu0
      %v965 = vadd.f32 0.0, %v964
      %v966 = vpop.f32.mrb[0].mxu0
      %967 = vmatprep.mubr.f32.mxu0 0.0
      %968 = vmatmul.mubr.f32.gmra.mrb[0].mxu0 %v779
      %v969 = vpop.f32.mrb[0].mxu0
      %v970 = vadd.f32 0.0, %v969
      %v971 = vpop.f32.mrb[0].mxu0
      %972 = vmatprep.mubr.f32.mxu0 0.0
      %973 = vmatmul.mubr.f32.gmra.mrb[0].mxu0 %v780
      %v974 = vpop.f32.mrb[0].mxu0
      %v975 = vadd.f32 0.0, %v974
      %v976 = vpop.f32.mrb[0].mxu0
      %977 = vmatprep.mubr.f32.mxu0 0.0
      %978 = vmatmul.mubr.f32.gmra.mrb[0].mxu0 %v781
      %v979 = vpop.f32.mrb[0].mxu0
      %v980 = vadd.f32 0.0, %v979
      %v981 = vpop.f32.mrb[0].mxu0
      %982 = vmatprep.mubr.f32.mxu0 0.0
      %983 = vmatmul.mubr.f32.gmra.mrb[0].mxu0 %v782
      %v984 = vpop.f32.mrb[0].mxu0
      %v985 = vadd.f32 0.0, %v984
      %v986 = vpop.f32.mrb[0].mxu0
      %987 = vmatprep.mubr.f32.mxu0 0.0
      %988 = vmatmul.mubr.f32.gmra.mrb[0].mxu0 %v783
      %v989 = vpop.f32.mrb[0].mxu0
      %v990 = vadd.f32 0.0, %v989
      %v991 = vpop.f32.mrb[0].mxu0
      %992 = vmatprep.mubr.f32.mxu0 0.0
      %993 = vmatmul.mubr.f32.gmra.mrb[0].mxu0 %v784
      %v994 = vpop.f32.mrb[0].mxu0
      %v995 = vadd.f32 0.0, %v994
      %v996 = vpop.f32.mrb[0].mxu0
      %997 = vmatprep.mubr.f32.mxu0 0.0
      %998 = vmatmul.mubr.f32.gmra.mrb[0].mxu0 %v785
      %v999 = vpop.f32.mrb[0].mxu0
      %v1000 = vadd.f32 0.0, %v999
      %v1001 = vpop.f32.mrb[0].mxu0
      %1002 = vmatprep.mubr.f32.mxu0 0.0
      %1003 = vmatmul.mubr.f32.gmra.mrb[0].mxu0 %v786
      %v1004 = vpop.f32.mrb[0].mxu0
      %v1005 = vadd.f32 0.0, %v1004
      %v1006 = vpop.f32.mrb[0].mxu0
      %1007 = vmatprep.mubr.f32.mxu0 0.0
      %1008 = vmatmul.mubr.f32.gmra.mrb[0].mxu0 %v787
      %v1009 = vpop.f32.mrb[0].mxu0
      %v1010 = vadd.f32 0.0, %v1009
      %v1011 = vpop.f32.mrb[0].mxu0
      %1012 = vmatprep.mubr.f32.mxu0 0.0
      %1013 = vmatmul.mubr.f32.gmra.mrb[0].mxu0 %v788
      %v1014 = vpop.f32.mrb[0].mxu0
      %v1015 = vadd.f32 0.0, %v1014
      %v1016 = vpop.f32.mrb[0].mxu0
      %1017 = vmatprep.mubr.f32.mxu0 0.0
      %1018 = vmatmul.mubr.f32.gmra.mrb[0].mxu0 %v789
      %v1019 = vpop.f32.mrb[0].mxu0
      %v1020 = vadd.f32 0.0, %v1019
      %v1021 = vpop.f32.mrb[0].mxu0
      %1022 = vmatprep.mubr.f32.mxu0 0.0
      %1023 = vmatmul.mubr.f32.gmra.mrb[0].mxu0 %v790
      %v1024 = vpop.f32.mrb[0].mxu0
      %v1025 = vadd.f32 0.0, %v1024
      %v1026 = vpop.f32.mrb[0].mxu0
      %1027 = vmatprep.mubr.f32.mxu0 0.0
      %1028 = vmatmul.mubr.f32.gmra.mrb[0].mxu0 %v791
      %v1029 = vpop.f32.mrb[0].mxu0
      %v1030 = vadd.f32 0.0, %v1029
      %v1031 = vpop.f32.mrb[0].mxu0
      %1032 = vdwg.mxu0
      %1033 = vmatprep.subr.mxu0 0.0
      %1034 = vmatpush1.msra.mxu0 %v744
      %1035 = vmatprep.subr.mxu0 0.0
      %1036 = vmatpush1.msra.mxu0 %v745
      %1037 = vmatprep.subr.mxu0 0.0
      %1038 = vmatpush1.msra.mxu0 %v746
      %1039 = vmatprep.subr.mxu0 0.0
      %1040 = vmatpush1.msra.mxu0 %v747
      %1041 = vmatprep.subr.mxu0 0.0
      %1042 = vmatpush1.msra.mxu0 %v748
      %1043 = vmatprep.subr.mxu0 0.0
      %1044 = vmatpush1.msra.mxu0 %v749
      %1045 = vmatprep.subr.mxu0 0.0
      %1046 = vmatpush1.msra.mxu0 %v750
      %1047 = vmatprep.subr.mxu0 0.0
      %1048 = vmatpush1.msra.mxu0 %v751
      %1049 = vmatprep.subr.mxu0 0.0
      %1050 = vmatpush1.msra.mxu0 %v752
      %1051 = vmatprep.subr.mxu0 0.0
      %1052 = vmatpush1.msra.mxu0 %v753
      %1053 = vmatprep.subr.mxu0 0.0
      %1054 = vmatpush1.msra.mxu0 %v754
      %1055 = vmatprep.subr.mxu0 0.0
      %1056 = vmatpush1.msra.mxu0 %v755
      %1057 = vmatprep.subr.mxu0 0.0
      %1058 = vmatpush1.msra.mxu0 %v756
      %1059 = vmatprep.subr.mxu0 0.0
      %1060 = vmatpush1.msra.mxu0 %v757
      %1061 = vmatprep.subr.mxu0 0.0
      %1062 = vmatpush1.msra.mxu0 %v758
      %1063 = vmatprep.subr.mxu0 0.0
      %1064 = vmatpush1.msra.mxu0 %v759
      %1065 = vmatprep.subr.mxu0 0.0
      %1066 = vmatpush1.msra.mxu0 0.0
      %1067 = vmatprep.subr.mxu0 0.0
      %1068 = vmatpush1.msra.mxu0 0.0
      %1069 = vmatprep.subr.mxu0 0.0
      %1070 = vmatpush1.msra.mxu0 0.0
      %1071 = vmatprep.subr.mxu0 0.0
      %1072 = vmatpush1.msra.mxu0 0.0
      %1073 = vmatprep.subr.mxu0 0.0
      %1074 = vmatpush1.msra.mxu0 0.0
      %1075 = vmatprep.subr.mxu0 0.0
      %1076 = vmatpush1.msra.mxu0 0.0
      %1077 = vmatprep.subr.mxu0 0.0
      %1078 = vmatpush1.msra.mxu0 0.0
      %1079 = vmatprep.subr.mxu0 0.0
      %1080 = vmatpush1.msra.mxu0 0.0
      %1081 = vmatprep.subr.mxu0 0.0
      %1082 = vmatpush1.msra.mxu0 0.0
      %1083 = vmatprep.subr.mxu0 0.0
      %1084 = vmatpush1.msra.mxu0 0.0
      %1085 = vmatprep.subr.mxu0 0.0
      %1086 = vmatpush1.msra.mxu0 0.0
      %1087 = vmatprep.subr.mxu0 0.0
      %1088 = vmatpush1.msra.mxu0 0.0
      %1089 = vmatprep.subr.mxu0 0.0
      %1090 = vmatpush1.msra.mxu0 0.0
      %1091 = vmatprep.subr.mxu0 0.0
      %1092 = vmatpush1.msra.mxu0 0.0
      %1093 = vmatprep.subr.mxu0 0.0
      %1094 = vmatpush1.msra.mxu0 0.0
      %1095 = vmatprep.subr.mxu0 0.0
      %1096 = vmatpush1.msra.mxu0 0.0
      %1097 = vmatprep.mubr.f32.mxu0 0.0
      %1098 = vmatmul.mubr.f32.gmra.mrb[0].mxu0 %v712
      %v1099 = vpop.f32.mrb[0].mxu0
      %v1100 = vadd.f32 %v875, %v1099
      %v1101 = vpop.f32.mrb[0].mxu0
      %1102 = vmatprep.mubr.f32.mxu0 0.0
      %1103 = vmatmul.mubr.f32.gmra.mrb[0].mxu0 %v713
      %v1104 = vpop.f32.mrb[0].mxu0
      %v1105 = vadd.f32 %v880, %v1104
      %v1106 = vpop.f32.mrb[0].mxu0
      %1107 = vmatprep.mubr.f32.mxu0 0.0
      %1108 = vmatmul.mubr.f32.gmra.mrb[0].mxu0 %v714
      %v1109 = vpop.f32.mrb[0].mxu0
      %v1110 = vadd.f32 %v885, %v1109
      %v1111 = vpop.f32.mrb[0].mxu0
      %1112 = vmatprep.mubr.f32.mxu0 0.0
      %1113 = vmatmul.mubr.f32.gmra.mrb[0].mxu0 %v715
      %v1114 = vpop.f32.mrb[0].mxu0
      %v1115 = vadd.f32 %v890, %v1114
      %v1116 = vpop.f32.mrb[0].mxu0
      %1117 = vmatprep.mubr.f32.mxu0 0.0
      %1118 = vmatmul.mubr.f32.gmra.mrb[0].mxu0 %v716
      %v1119 = vpop.f32.mrb[0].mxu0
      %v1120 = vadd.f32 %v895, %v1119
      %v1121 = vpop.f32.mrb[0].mxu0
      %1122 = vmatprep.mubr.f32.mxu0 0.0
      %1123 = vmatmul.mubr.f32.gmra.mrb[0].mxu0 %v717
      %v1124 = vpop.f32.mrb[0].mxu0
      %v1125 = vadd.f32 %v900, %v1124
      %v1126 = vpop.f32.mrb[0].mxu0
      %1127 = vmatprep.mubr.f32.mxu0 0.0
      %1128 = vmatmul.mubr.f32.gmra.mrb[0].mxu0 %v718
      %v1129 = vpop.f32.mrb[0].mxu0
      %v1130 = vadd.f32 %v905, %v1129
      %v1131 = vpop.f32.mrb[0].mxu0
      %1132 = vmatprep.mubr.f32.mxu0 0.0
      %1133 = vmatmul.mubr.f32.gmra.mrb[0].mxu0 %v719
      %v1134 = vpop.f32.mrb[0].mxu0
      %v1135 = vadd.f32 %v910, %v1134
      %v1136 = vpop.f32.mrb[0].mxu0
      %1137 = vmatprep.mubr.f32.mxu0 0.0
      %1138 = vmatmul.mubr.f32.gmra.mrb[0].mxu0 %v720
      %v1139 = vpop.f32.mrb[0].mxu0
      %v1140 = vadd.f32 %v915, %v1139
      %v1141 = vpop.f32.mrb[0].mxu0
      %1142 = vmatprep.mubr.f32.mxu0 0.0
      %1143 = vmatmul.mubr.f32.gmra.mrb[0].mxu0 %v721
      %v1144 = vpop.f32.mrb[0].mxu0
      %v1145 = vadd.f32 %v920, %v1144
      %v1146 = vpop.f32.mrb[0].mxu0
      %1147 = vmatprep.mubr.f32.mxu0 0.0
      %1148 = vmatmul.mubr.f32.gmra.mrb[0].mxu0 %v722
      %v1149 = vpop.f32.mrb[0].mxu0
      %v1150 = vadd.f32 %v925, %v1149
      %v1151 = vpop.f32.mrb[0].mxu0
      %1152 = vmatprep.mubr.f32.mxu0 0.0
      %1153 = vmatmul.mubr.f32.gmra.mrb[0].mxu0 %v723
      %v1154 = vpop.f32.mrb[0].mxu0
      %v1155 = vadd.f32 %v930, %v1154
      %v1156 = vpop.f32.mrb[0].mxu0
      %1157 = vmatprep.mubr.f32.mxu0 0.0
      %1158 = vmatmul.mubr.f32.gmra.mrb[0].mxu0 %v724
      %v1159 = vpop.f32.mrb[0].mxu0
      %v1160 = vadd.f32 %v935, %v1159
      %v1161 = vpop.f32.mrb[0].mxu0
      %1162 = vmatprep.mubr.f32.mxu0 0.0
      %1163 = vmatmul.mubr.f32.gmra.mrb[0].mxu0 %v725
      %v1164 = vpop.f32.mrb[0].mxu0
      %v1165 = vadd.f32 %v940, %v1164
      %v1166 = vpop.f32.mrb[0].mxu0
      %1167 = vmatprep.mubr.f32.mxu0 0.0
      %1168 = vmatmul.mubr.f32.gmra.mrb[0].mxu0 %v726
      %v1169 = vpop.f32.mrb[0].mxu0
      %v1170 = vadd.f32 %v945, %v1169
      %v1171 = vpop.f32.mrb[0].mxu0
      %1172 = vmatprep.mubr.f32.mxu0 0.0
      %1173 = vmatmul.mubr.f32.gmra.mrb[0].mxu0 %v727
      %v1174 = vpop.f32.mrb[0].mxu0
      %v1175 = vadd.f32 %v950, %v1174
      %v1176 = vpop.f32.mrb[0].mxu0
      %1177 = vmatprep.mubr.f32.mxu0 0.0
      %1178 = vmatmul.mubr.f32.gmra.mrb[0].mxu0 %v728
      %v1179 = vpop.f32.mrb[0].mxu0
      %v1180 = vadd.f32 %v955, %v1179
      %v1181 = vpop.f32.mrb[0].mxu0
      %1182 = vmatprep.mubr.f32.mxu0 0.0
      %1183 = vmatmul.mubr.f32.gmra.mrb[0].mxu0 %v729
      %v1184 = vpop.f32.mrb[0].mxu0
      %v1185 = vadd.f32 %v960, %v1184
      %v1186 = vpop.f32.mrb[0].mxu0
      %1187 = vmatprep.mubr.f32.mxu0 0.0
      %1188 = vmatmul.mubr.f32.gmra.mrb[0].mxu0 %v730
      %v1189 = vpop.f32.mrb[0].mxu0
      %v1190 = vadd.f32 %v965, %v1189
      %v1191 = vpop.f32.mrb[0].mxu0
      %1192 = vmatprep.mubr.f32.mxu0 0.0
      %1193 = vmatmul.mubr.f32.gmra.mrb[0].mxu0 %v731
      %v1194 = vpop.f32.mrb[0].mxu0
      %v1195 = vadd.f32 %v970, %v1194
      %v1196 = vpop.f32.mrb[0].mxu0
      %1197 = vmatprep.mubr.f32.mxu0 0.0
      %1198 = vmatmul.mubr.f32.gmra.mrb[0].mxu0 %v732
      %v1199 = vpop.f32.mrb[0].mxu0
      %v1200 = vadd.f32 %v975, %v1199
      %v1201 = vpop.f32.mrb[0].mxu0
      %1202 = vmatprep.mubr.f32.mxu0 0.0
      %1203 = vmatmul.mubr.f32.gmra.mrb[0].mxu0 %v733
      %v1204 = vpop.f32.mrb[0].mxu0
      %v1205 = vadd.f32 %v980, %v1204
      %v1206 = vpop.f32.mrb[0].mxu0
      %1207 = vmatprep.mubr.f32.mxu0 0.0
      %1208 = vmatmul.mubr.f32.gmra.mrb[0].mxu0 %v734
      %v1209 = vpop.f32.mrb[0].mxu0
      %v1210 = vadd.f32 %v985, %v1209
      %v1211 = vpop.f32.mrb[0].mxu0
      %1212 = vmatprep.mubr.f32.mxu0 0.0
      %1213 = vmatmul.mubr.f32.gmra.mrb[0].mxu0 %v735
      %v1214 = vpop.f32.mrb[0].mxu0
      %v1215 = vadd.f32 %v990, %v1214
      %v1216 = vpop.f32.mrb[0].mxu0
      %1217 = vmatprep.mubr.f32.mxu0 0.0
      %1218 = vmatmul.mubr.f32.gmra.mrb[0].mxu0 %v736
      %v1219 = vpop.f32.mrb[0].mxu0
      %v1220 = vadd.f32 %v995, %v1219
      %v1221 = vpop.f32.mrb[0].mxu0
      %1222 = vmatprep.mubr.f32.mxu0 0.0
      %1223 = vmatmul.mubr.f32.gmra.mrb[0].mxu0 %v737
      %v1224 = vpop.f32.mrb[0].mxu0
      %v1225 = vadd.f32 %v1000, %v1224
      %v1226 = vpop.f32.mrb[0].mxu0
      %1227 = vmatprep.mubr.f32.mxu0 0.0
      %1228 = vmatmul.mubr.f32.gmra.mrb[0].mxu0 %v738
      %v1229 = vpop.f32.mrb[0].mxu0
      %v1230 = vadd.f32 %v1005, %v1229
      %v1231 = vpop.f32.mrb[0].mxu0
      %1232 = vmatprep.mubr.f32.mxu0 0.0
      %1233 = vmatmul.mubr.f32.gmra.mrb[0].mxu0 %v739
      %v1234 = vpop.f32.mrb[0].mxu0
      %v1235 = vadd.f32 %v1010, %v1234
      %v1236 = vpop.f32.mrb[0].mxu0
      %1237 = vmatprep.mubr.f32.mxu0 0.0
      %1238 = vmatmul.mubr.f32.gmra.mrb[0].mxu0 %v740
      %v1239 = vpop.f32.mrb[0].mxu0
      %v1240 = vadd.f32 %v1015, %v1239
      %v1241 = vpop.f32.mrb[0].mxu0
      %1242 = vmatprep.mubr.f32.mxu0 0.0
      %1243 = vmatmul.mubr.f32.gmra.mrb[0].mxu0 %v741
      %v1244 = vpop.f32.mrb[0].mxu0
      %v1245 = vadd.f32 %v1020, %v1244
      %v1246 = vpop.f32.mrb[0].mxu0
      %1247 = vmatprep.mubr.f32.mxu0 0.0
      %1248 = vmatmul.mubr.f32.gmra.mrb[0].mxu0 %v742
      %v1249 = vpop.f32.mrb[0].mxu0
      %v1250 = vadd.f32 %v1025, %v1249
      %v1251 = vpop.f32.mrb[0].mxu0
      %1252 = vmatprep.mubr.f32.mxu0 0.0
      %1253 = vmatmul.mubr.f32.gmra.mrb[0].mxu0 %v743
      %v1254 = vpop.f32.mrb[0].mxu0
      %v1255 = vadd.f32 %v1030, %v1254
      %v1256 = vpop.f32.mrb[0].mxu0
      %1257 = vdwg.mxu0
      %v1258 = vld [vmem:[%s5] sm:$0x1]
      %v1260 = vlaneseq
      %v1261 = vshrl.u32 %v1260, 7
      %v1262 = vsub.s32 0, %v1261
      %v1263 = vrot.slane %v1258, %v1262
      %v1265 = vadd.f32 %v1100, %v1263
      %v1266 = vadd.f32 %v1105, %v1263
      %v1267 = vadd.f32 %v1110, %v1263
      %v1268 = vadd.f32 %v1115, %v1263
      %v1269 = vadd.f32 %v1120, %v1263
      %v1270 = vadd.f32 %v1125, %v1263
      %v1271 = vadd.f32 %v1130, %v1263
      %v1272 = vadd.f32 %v1135, %v1263
      %v1273 = vadd.f32 %v1140, %v1263
      %v1274 = vadd.f32 %v1145, %v1263
      %v1275 = vadd.f32 %v1150, %v1263
      %v1276 = vadd.f32 %v1155, %v1263
      %v1277 = vadd.f32 %v1160, %v1263
      %v1278 = vadd.f32 %v1165, %v1263
      %v1279 = vadd.f32 %v1170, %v1263
      %v1280 = vadd.f32 %v1175, %v1263
      %v1281 = vadd.f32 %v1180, %v1263
      %v1282 = vadd.f32 %v1185, %v1263
      %v1283 = vadd.f32 %v1190, %v1263
      %v1284 = vadd.f32 %v1195, %v1263
      %v1285 = vadd.f32 %v1200, %v1263
      %v1286 = vadd.f32 %v1205, %v1263
      %v1287 = vadd.f32 %v1210, %v1263
      %v1288 = vadd.f32 %v1215, %v1263
      %v1289 = vadd.f32 %v1220, %v1263
      %v1290 = vadd.f32 %v1225, %v1263
      %v1291 = vadd.f32 %v1230, %v1263
      %v1292 = vadd.f32 %v1235, %v1263
      %v1293 = vadd.f32 %v1240, %v1263
      %v1294 = vadd.f32 %v1245, %v1263
      %v1295 = vadd.f32 %v1250, %v1263
      %v1296 = vadd.f32 %v1255, %v1263
      %vm1297 = vcmp.ge.f32.partialorder %v1265, 0.0
      %vm1298 = vcmp.ge.f32.partialorder %v1266, 0.0
      %vm1299 = vcmp.ge.f32.partialorder %v1267, 0.0
      %vm1300 = vcmp.ge.f32.partialorder %v1268, 0.0
      %vm1301 = vcmp.ge.f32.partialorder %v1269, 0.0
      %vm1302 = vcmp.ge.f32.partialorder %v1270, 0.0
      %vm1303 = vcmp.ge.f32.partialorder %v1271, 0.0
      %vm1304 = vcmp.ge.f32.partialorder %v1272, 0.0
      %vm1305 = vcmp.ge.f32.partialorder %v1273, 0.0
      %vm1306 = vcmp.ge.f32.partialorder %v1274, 0.0
      %vm1307 = vcmp.ge.f32.partialorder %v1275, 0.0
      %vm1308 = vcmp.ge.f32.partialorder %v1276, 0.0
      %vm1309 = vcmp.ge.f32.partialorder %v1277, 0.0
      %vm1310 = vcmp.ge.f32.partialorder %v1278, 0.0
      %vm1311 = vcmp.ge.f32.partialorder %v1279, 0.0
      %vm1312 = vcmp.ge.f32.partialorder %v1280, 0.0
      %vm1313 = vcmp.ge.f32.partialorder %v1281, 0.0
      %vm1314 = vcmp.ge.f32.partialorder %v1282, 0.0
      %vm1315 = vcmp.ge.f32.partialorder %v1283, 0.0
      %vm1316 = vcmp.ge.f32.partialorder %v1284, 0.0
      %vm1317 = vcmp.ge.f32.partialorder %v1285, 0.0
      %vm1318 = vcmp.ge.f32.partialorder %v1286, 0.0
      %vm1319 = vcmp.ge.f32.partialorder %v1287, 0.0
      %vm1320 = vcmp.ge.f32.partialorder %v1288, 0.0
      %vm1321 = vcmp.ge.f32.partialorder %v1289, 0.0
      %vm1322 = vcmp.ge.f32.partialorder %v1290, 0.0
      %vm1323 = vcmp.ge.f32.partialorder %v1291, 0.0
      %vm1324 = vcmp.ge.f32.partialorder %v1292, 0.0
      %vm1325 = vcmp.ge.f32.partialorder %v1293, 0.0
      %vm1326 = vcmp.ge.f32.partialorder %v1294, 0.0
      %vm1327 = vcmp.ge.f32.partialorder %v1295, 0.0
      %vm1328 = vcmp.ge.f32.partialorder %v1296, 0.0
      %v1329 = vmul.f32 %v1265, 0.01
      %v1330 = vmul.f32 %v1266, 0.01
      %v1331 = vmul.f32 %v1267, 0.01
      %v1332 = vmul.f32 %v1268, 0.01
      %v1333 = vmul.f32 %v1269, 0.01
      %v1334 = vmul.f32 %v1270, 0.01
      %v1335 = vmul.f32 %v1271, 0.01
      %v1336 = vmul.f32 %v1272, 0.01
      %v1337 = vmul.f32 %v1273, 0.01
      %v1338 = vmul.f32 %v1274, 0.01
      %v1339 = vmul.f32 %v1275, 0.01
      %v1340 = vmul.f32 %v1276, 0.01
      %v1341 = vmul.f32 %v1277, 0.01
      %v1342 = vmul.f32 %v1278, 0.01
      %v1343 = vmul.f32 %v1279, 0.01
      %v1344 = vmul.f32 %v1280, 0.01
      %v1345 = vmul.f32 %v1281, 0.01
      %v1346 = vmul.f32 %v1282, 0.01
      %v1347 = vmul.f32 %v1283, 0.01
      %v1348 = vmul.f32 %v1284, 0.01
      %v1349 = vmul.f32 %v1285, 0.01
      %v1350 = vmul.f32 %v1286, 0.01
      %v1351 = vmul.f32 %v1287, 0.01
      %v1352 = vmul.f32 %v1288, 0.01
      %v1353 = vmul.f32 %v1289, 0.01
      %v1354 = vmul.f32 %v1290, 0.01
      %v1355 = vmul.f32 %v1291, 0.01
      %v1356 = vmul.f32 %v1292, 0.01
      %v1357 = vmul.f32 %v1293, 0.01
      %v1358 = vmul.f32 %v1294, 0.01
      %v1359 = vmul.f32 %v1295, 0.01
      %v1360 = vmul.f32 %v1296, 0.01
      %v1361 = vsel %vm1297, %v1265, %v1329
      %v1362 = vsel %vm1298, %v1266, %v1330
      %v1363 = vsel %vm1299, %v1267, %v1331
      %v1364 = vsel %vm1300, %v1268, %v1332
      %v1365 = vsel %vm1301, %v1269, %v1333
      %v1366 = vsel %vm1302, %v1270, %v1334
      %v1367 = vsel %vm1303, %v1271, %v1335
      %v1368 = vsel %vm1304, %v1272, %v1336
      %v1369 = vsel %vm1305, %v1273, %v1337
      %v1370 = vsel %vm1306, %v1274, %v1338
      %v1371 = vsel %vm1307, %v1275, %v1339
      %v1372 = vsel %vm1308, %v1276, %v1340
      %v1373 = vsel %vm1309, %v1277, %v1341
      %v1374 = vsel %vm1310, %v1278, %v1342
      %v1375 = vsel %vm1311, %v1279, %v1343
      %v1376 = vsel %vm1312, %v1280, %v1344
      %v1377 = vsel %vm1313, %v1281, %v1345
      %v1378 = vsel %vm1314, %v1282, %v1346
      %v1379 = vsel %vm1315, %v1283, %v1347
      %v1380 = vsel %vm1316, %v1284, %v1348
      %v1381 = vsel %vm1317, %v1285, %v1349
      %v1382 = vsel %vm1318, %v1286, %v1350
      %v1383 = vsel %vm1319, %v1287, %v1351
      %v1384 = vsel %vm1320, %v1288, %v1352
      %v1385 = vsel %vm1321, %v1289, %v1353
      %v1386 = vsel %vm1322, %v1290, %v1354
      %v1387 = vsel %vm1323, %v1291, %v1355
      %v1388 = vsel %vm1324, %v1292, %v1356
      %v1389 = vsel %vm1325, %v1293, %v1357
      %v1390 = vsel %vm1326, %v1294, %v1358
      %v1391 = vsel %vm1327, %v1295, %v1359
      %v1392 = vsel %vm1328, %v1296, %v1360
      %v1393 = vmul.f32 %v1361, %v1361
      %v1394 = vmul.f32 %v1362, %v1362
      %v1395 = vmul.f32 %v1363, %v1363
      %v1396 = vmul.f32 %v1364, %v1364
      %v1397 = vmul.f32 %v1365, %v1365
      %v1398 = vmul.f32 %v1366, %v1366
      %v1399 = vmul.f32 %v1367, %v1367
      %v1400 = vmul.f32 %v1368, %v1368
      %v1401 = vmul.f32 %v1369, %v1369
      %v1402 = vmul.f32 %v1370, %v1370
      %v1403 = vmul.f32 %v1371, %v1371
      %v1404 = vmul.f32 %v1372, %v1372
      %v1405 = vmul.f32 %v1373, %v1373
      %v1406 = vmul.f32 %v1374, %v1374
      %v1407 = vmul.f32 %v1375, %v1375
      %v1408 = vmul.f32 %v1376, %v1376
      %v1409 = vmul.f32 %v1377, %v1377
      %v1410 = vmul.f32 %v1378, %v1378
      %v1411 = vmul.f32 %v1379, %v1379
      %v1412 = vmul.f32 %v1380, %v1380
      %v1413 = vmul.f32 %v1381, %v1381
      %v1414 = vmul.f32 %v1382, %v1382
      %v1415 = vmul.f32 %v1383, %v1383
      %v1416 = vmul.f32 %v1384, %v1384
      %v1417 = vmul.f32 %v1385, %v1385
      %v1418 = vmul.f32 %v1386, %v1386
      %v1419 = vmul.f32 %v1387, %v1387
      %v1420 = vmul.f32 %v1388, %v1388
      %v1421 = vmul.f32 %v1389, %v1389
      %v1422 = vmul.f32 %v1390, %v1390
      %v1423 = vmul.f32 %v1391, %v1391
      %v1424 = vmul.f32 %v1392, %v1392
      %1425 = vadd.xlane.f32.xlu0 %v1393
      %v1426 = vpop.xlane.xlu0 %1425
      %1427 = vadd.xlane.f32.xlu0 %v1394
      %v1428 = vpop.xlane.xlu0 %1427
      %1429 = vadd.xlane.f32.xlu0 %v1395
      %v1430 = vpop.xlane.xlu0 %1429
      %1431 = vadd.xlane.f32.xlu0 %v1396
      %v1432 = vpop.xlane.xlu0 %1431
      %1433 = vadd.xlane.f32.xlu0 %v1397
      %v1434 = vpop.xlane.xlu0 %1433
      %1435 = vadd.xlane.f32.xlu0 %v1398
      %v1436 = vpop.xlane.xlu0 %1435
      %1437 = vadd.xlane.f32.xlu0 %v1399
      %v1438 = vpop.xlane.xlu0 %1437
      %1439 = vadd.xlane.f32.xlu0 %v1400
      %v1440 = vpop.xlane.xlu0 %1439
      %1441 = vadd.xlane.f32.xlu0 %v1401
      %v1442 = vpop.xlane.xlu0 %1441
      %1443 = vadd.xlane.f32.xlu0 %v1402
      %v1444 = vpop.xlane.xlu0 %1443
      %1445 = vadd.xlane.f32.xlu0 %v1403
      %v1446 = vpop.xlane.xlu0 %1445
      %1447 = vadd.xlane.f32.xlu0 %v1404
      %v1448 = vpop.xlane.xlu0 %1447
      %1449 = vadd.xlane.f32.xlu0 %v1405
      %v1450 = vpop.xlane.xlu0 %1449
      %1451 = vadd.xlane.f32.xlu0 %v1406
      %v1452 = vpop.xlane.xlu0 %1451
      %1453 = vadd.xlane.f32.xlu0 %v1407
      %v1454 = vpop.xlane.xlu0 %1453
      %1455 = vadd.xlane.f32.xlu0 %v1408
      %v1456 = vpop.xlane.xlu0 %1455
      %1457 = vadd.xlane.f32.xlu0 %v1409
      %v1458 = vpop.xlane.xlu0 %1457
      %1459 = vadd.xlane.f32.xlu0 %v1410
      %v1460 = vpop.xlane.xlu0 %1459
      %1461 = vadd.xlane.f32.xlu0 %v1411
      %v1462 = vpop.xlane.xlu0 %1461
      %1463 = vadd.xlane.f32.xlu0 %v1412
      %v1464 = vpop.xlane.xlu0 %1463
      %1465 = vadd.xlane.f32.xlu0 %v1413
      %v1466 = vpop.xlane.xlu0 %1465
      %1467 = vadd.xlane.f32.xlu0 %v1414
      %v1468 = vpop.xlane.xlu0 %1467
      %1469 = vadd.xlane.f32.xlu0 %v1415
      %v1470 = vpop.xlane.xlu0 %1469
      %1471 = vadd.xlane.f32.xlu0 %v1416
      %v1472 = vpop.xlane.xlu0 %1471
      %1473 = vadd.xlane.f32.xlu0 %v1417
      %v1474 = vpop.xlane.xlu0 %1473
      %1475 = vadd.xlane.f32.xlu0 %v1418
      %v1476 = vpop.xlane.xlu0 %1475
      %1477 = vadd.xlane.f32.xlu0 %v1419
      %v1478 = vpop.xlane.xlu0 %1477
      %1479 = vadd.xlane.f32.xlu0 %v1420
      %v1480 = vpop.xlane.xlu0 %1479
      %1481 = vadd.xlane.f32.xlu0 %v1421
      %v1482 = vpop.xlane.xlu0 %1481
      %1483 = vadd.xlane.f32.xlu0 %v1422
      %v1484 = vpop.xlane.xlu0 %1483
      %1485 = vadd.xlane.f32.xlu0 %v1423
      %v1486 = vpop.xlane.xlu0 %1485
      %1487 = vadd.xlane.f32.xlu0 %v1424
      %v1488 = vpop.xlane.xlu0 %1487
      %v1489 = vmax.f32 %v1426, 1e-24
      %v1490 = vmax.f32 %v1428, 1e-24
      %v1491 = vmax.f32 %v1430, 1e-24
      %v1492 = vmax.f32 %v1432, 1e-24
      %v1493 = vmax.f32 %v1434, 1e-24
      %v1494 = vmax.f32 %v1436, 1e-24
      %v1495 = vmax.f32 %v1438, 1e-24
      %v1496 = vmax.f32 %v1440, 1e-24
      %v1497 = vmax.f32 %v1442, 1e-24
      %v1498 = vmax.f32 %v1444, 1e-24
      %v1499 = vmax.f32 %v1446, 1e-24
      %v1500 = vmax.f32 %v1448, 1e-24
      %v1501 = vmax.f32 %v1450, 1e-24
      %v1502 = vmax.f32 %v1452, 1e-24
      %v1503 = vmax.f32 %v1454, 1e-24
      %v1504 = vmax.f32 %v1456, 1e-24
      %v1505 = vmax.f32 %v1458, 1e-24
      %v1506 = vmax.f32 %v1460, 1e-24
      %v1507 = vmax.f32 %v1462, 1e-24
      %v1508 = vmax.f32 %v1464, 1e-24
      %v1509 = vmax.f32 %v1466, 1e-24
      %v1510 = vmax.f32 %v1468, 1e-24
      %v1511 = vmax.f32 %v1470, 1e-24
      %v1512 = vmax.f32 %v1472, 1e-24
      %v1513 = vmax.f32 %v1474, 1e-24
      %v1514 = vmax.f32 %v1476, 1e-24
      %v1515 = vmax.f32 %v1478, 1e-24
      %v1516 = vmax.f32 %v1480, 1e-24
      %v1517 = vmax.f32 %v1482, 1e-24
      %v1518 = vmax.f32 %v1484, 1e-24
      %v1519 = vmax.f32 %v1486, 1e-24
      %v1520 = vmax.f32 %v1488, 1e-24
      %v1521 = vrsqrt.pop %v1489
      %v1522 = vrsqrt.pop %v1490
      %v1523 = vrsqrt.pop %v1491
      %v1524 = vrsqrt.pop %v1492
      %v1525 = vrsqrt.pop %v1493
      %v1526 = vrsqrt.pop %v1494
      %v1527 = vrsqrt.pop %v1495
      %v1528 = vrsqrt.pop %v1496
      %v1529 = vrsqrt.pop %v1497
      %v1530 = vrsqrt.pop %v1498
      %v1531 = vrsqrt.pop %v1499
      %v1532 = vrsqrt.pop %v1500
      %v1533 = vrsqrt.pop %v1501
      %v1534 = vrsqrt.pop %v1502
      %v1535 = vrsqrt.pop %v1503
      %v1536 = vrsqrt.pop %v1504
      %v1537 = vrsqrt.pop %v1505
      %v1538 = vrsqrt.pop %v1506
      %v1539 = vrsqrt.pop %v1507
      %v1540 = vrsqrt.pop %v1508
      %v1541 = vrsqrt.pop %v1509
      %v1542 = vrsqrt.pop %v1510
      %v1543 = vrsqrt.pop %v1511
      %v1544 = vrsqrt.pop %v1512
      %v1545 = vrsqrt.pop %v1513
      %v1546 = vrsqrt.pop %v1514
      %v1547 = vrsqrt.pop %v1515
      %v1548 = vrsqrt.pop %v1516
      %v1549 = vrsqrt.pop %v1517
      %v1550 = vrsqrt.pop %v1518
      %v1551 = vrsqrt.pop %v1519
      %v1552 = vrsqrt.pop %v1520
      %v1553 = vmul.f32 %v1361, %v1521
      %v1554 = vmul.f32 %v1362, %v1522
      %v1555 = vmul.f32 %v1363, %v1523
      %v1556 = vmul.f32 %v1364, %v1524
      %v1557 = vmul.f32 %v1365, %v1525
      %v1558 = vmul.f32 %v1366, %v1526
      %v1559 = vmul.f32 %v1367, %v1527
      %v1560 = vmul.f32 %v1368, %v1528
      %v1561 = vmul.f32 %v1369, %v1529
      %v1562 = vmul.f32 %v1370, %v1530
      %v1563 = vmul.f32 %v1371, %v1531
      %v1564 = vmul.f32 %v1372, %v1532
      %v1565 = vmul.f32 %v1373, %v1533
      %v1566 = vmul.f32 %v1374, %v1534
      %v1567 = vmul.f32 %v1375, %v1535
      %v1568 = vmul.f32 %v1376, %v1536
      %v1569 = vmul.f32 %v1377, %v1537
      %v1570 = vmul.f32 %v1378, %v1538
      %v1571 = vmul.f32 %v1379, %v1539
      %v1572 = vmul.f32 %v1380, %v1540
      %v1573 = vmul.f32 %v1381, %v1541
      %v1574 = vmul.f32 %v1382, %v1542
      %v1575 = vmul.f32 %v1383, %v1543
      %v1576 = vmul.f32 %v1384, %v1544
      %v1577 = vmul.f32 %v1385, %v1545
      %v1578 = vmul.f32 %v1386, %v1546
      %v1579 = vmul.f32 %v1387, %v1547
      %v1580 = vmul.f32 %v1388, %v1548
      %v1581 = vmul.f32 %v1389, %v1549
      %v1582 = vmul.f32 %v1390, %v1550
      %v1583 = vmul.f32 %v1391, %v1551
      %v1584 = vmul.f32 %v1392, %v1552
      %1585 = vst [vmem:[#allocation12] sm:$0xff] %v1553
      %1586 = vst [vmem:[#allocation12 + $0x8] sm:$0xff] %v1554
      %1587 = vst [vmem:[#allocation12 + $0x10] sm:$0xff] %v1555
      %1588 = vst [vmem:[#allocation12 + $0x18] sm:$0xff] %v1556
      %1589 = vst [vmem:[#allocation12 + $0x20] sm:$0xff] %v1557
      %1590 = vst [vmem:[#allocation12 + $0x28] sm:$0xff] %v1558
      %1591 = vst [vmem:[#allocation12 + $0x30] sm:$0xff] %v1559
      %1592 = vst [vmem:[#allocation12 + $0x38] sm:$0xff] %v1560
      %1593 = vst [vmem:[#allocation12 + $0x40] sm:$0xff] %v1561
      %1594 = vst [vmem:[#allocation12 + $0x48] sm:$0xff] %v1562
      %1595 = vst [vmem:[#allocation12 + $0x50] sm:$0xff] %v1563
      %1596 = vst [vmem:[#allocation12 + $0x58] sm:$0xff] %v1564
      %1597 = vst [vmem:[#allocation12 + $0x60] sm:$0xff] %v1565
      %1598 = vst [vmem:[#allocation12 + $0x68] sm:$0xff] %v1566
      %1599 = vst [vmem:[#allocation12 + $0x70] sm:$0xff] %v1567
      %1600 = vst [vmem:[#allocation12 + $0x78] sm:$0xff] %v1568
      %1601 = vst [vmem:[#allocation12 + $0x80] sm:$0xff] %v1569
      %1602 = vst [vmem:[#allocation12 + $0x88] sm:$0xff] %v1570
      %1603 = vst [vmem:[#allocation12 + $0x90] sm:$0xff] %v1571
      %1604 = vst [vmem:[#allocation12 + $0x98] sm:$0xff] %v1572
      %1605 = vst [vmem:[#allocation12 + $0xa0] sm:$0xff] %v1573
      %1606 = vst [vmem:[#allocation12 + $0xa8] sm:$0xff] %v1574
      %1607 = vst [vmem:[#allocation12 + $0xb0] sm:$0xff] %v1575
      %1608 = vst [vmem:[#allocation12 + $0xb8] sm:$0xff] %v1576
      %1609 = vst [vmem:[#allocation12 + $0xc0] sm:$0xff] %v1577
      %1610 = vst [vmem:[#allocation12 + $0xc8] sm:$0xff] %v1578
      %1611 = vst [vmem:[#allocation12 + $0xd0] sm:$0xff] %v1579
      %1612 = vst [vmem:[#allocation12 + $0xd8] sm:$0xff] %v1580
      %1613 = vst [vmem:[#allocation12 + $0xe0] sm:$0xff] %v1581
      %1614 = vst [vmem:[#allocation12 + $0xe8] sm:$0xff] %v1582
      %1615 = vst [vmem:[#allocation12 + $0xf0] sm:$0xff] %v1583
      %1616 = vst [vmem:[#allocation12 + $0xf8] sm:$0xff] %v1584
      %v1617 = vpack.c.bf16 %v1554, %v1553
      %v1618 = vpack.c.bf16 %v1556, %v1555
      %v1619 = vpack.c.bf16 %v1558, %v1557
      %v1620 = vpack.c.bf16 %v1560, %v1559
      %v1621 = vpack.c.bf16 %v1562, %v1561
      %v1622 = vpack.c.bf16 %v1564, %v1563
      %v1623 = vpack.c.bf16 %v1566, %v1565
      %v1624 = vpack.c.bf16 %v1568, %v1567
      %v1625 = vpack.c.bf16 %v1570, %v1569
      %v1626 = vpack.c.bf16 %v1572, %v1571
      %v1627 = vpack.c.bf16 %v1574, %v1573
      %v1628 = vpack.c.bf16 %v1576, %v1575
      %v1629 = vpack.c.bf16 %v1578, %v1577
      %v1630 = vpack.c.bf16 %v1580, %v1579
      %v1631 = vpack.c.bf16 %v1582, %v1581
      %v1632 = vpack.c.bf16 %v1584, %v1583
      %v1649 = vunpack.c.l.b16 %v1617
      %v1650 = vunpack.c.h.b16 %v1617
      %v1651 = vunpack.c.l.b16 %v1618
      %v1652 = vunpack.c.h.b16 %v1618
      %v1653 = vunpack.c.l.b16 %v1619
      %v1654 = vunpack.c.h.b16 %v1619
      %v1655 = vunpack.c.l.b16 %v1620
      %v1656 = vunpack.c.h.b16 %v1620
      %v1657 = vunpack.c.l.b16 %v1621
      %v1658 = vunpack.c.h.b16 %v1621
      %v1659 = vunpack.c.l.b16 %v1622
      %v1660 = vunpack.c.h.b16 %v1622
      %v1661 = vunpack.c.l.b16 %v1623
      %v1662 = vunpack.c.h.b16 %v1623
      %v1663 = vunpack.c.l.b16 %v1624
      %v1664 = vunpack.c.h.b16 %v1624
      %v1665 = vunpack.c.l.b16 %v1625
      %v1666 = vunpack.c.h.b16 %v1625
      %v1667 = vunpack.c.l.b16 %v1626
      %v1668 = vunpack.c.h.b16 %v1626
      %v1669 = vunpack.c.l.b16 %v1627
      %v1670 = vunpack.c.h.b16 %v1627
      %v1671 = vunpack.c.l.b16 %v1628
      %v1672 = vunpack.c.h.b16 %v1628
      %v1673 = vunpack.c.l.b16 %v1629
      %v1674 = vunpack.c.h.b16 %v1629
      %v1675 = vunpack.c.l.b16 %v1630
      %v1676 = vunpack.c.h.b16 %v1630
      %v1677 = vunpack.c.l.b16 %v1631
      %v1678 = vunpack.c.h.b16 %v1631
      %v1679 = vunpack.c.l.b16 %v1632
      %v1680 = vunpack.c.h.b16 %v1632
      %v1681 = vpack.c.b16 %v1649, %v1649
      %v1682 = vpack.c.b16 %v1650, %v1650
      %v1683 = vpack.c.b16 %v1651, %v1651
      %v1684 = vpack.c.b16 %v1652, %v1652
      %v1685 = vpack.c.b16 %v1653, %v1653
      %v1686 = vpack.c.b16 %v1654, %v1654
      %v1687 = vpack.c.b16 %v1655, %v1655
      %v1688 = vpack.c.b16 %v1656, %v1656
      %v1689 = vpack.c.b16 %v1657, %v1657
      %v1690 = vpack.c.b16 %v1658, %v1658
      %v1691 = vpack.c.b16 %v1659, %v1659
      %v1692 = vpack.c.b16 %v1660, %v1660
      %v1693 = vpack.c.b16 %v1661, %v1661
      %v1694 = vpack.c.b16 %v1662, %v1662
      %v1695 = vpack.c.b16 %v1663, %v1663
      %v1696 = vpack.c.b16 %v1664, %v1664
      %v1697 = vpack.c.b16 %v1665, %v1665
      %v1698 = vpack.c.b16 %v1666, %v1666
      %v1699 = vpack.c.b16 %v1667, %v1667
      %v1700 = vpack.c.b16 %v1668, %v1668
      %v1701 = vpack.c.b16 %v1669, %v1669
      %v1702 = vpack.c.b16 %v1670, %v1670
      %v1703 = vpack.c.b16 %v1671, %v1671
      %v1704 = vpack.c.b16 %v1672, %v1672
      %v1705 = vpack.c.b16 %v1673, %v1673
      %v1706 = vpack.c.b16 %v1674, %v1674
      %v1707 = vpack.c.b16 %v1675, %v1675
      %v1708 = vpack.c.b16 %v1676, %v1676
      %v1709 = vpack.c.b16 %v1677, %v1677
      %v1710 = vpack.c.b16 %v1678, %v1678
      %v1711 = vpack.c.b16 %v1679, %v1679
      %v1712 = vpack.c.b16 %v1680, %v1680
      %1745 = vst [vmem:[#allocation13] sm:$0xf] %v1681
      %1746 = vst [vmem:[#allocation13 + $0x4] sm:$0xf] %v1682
      %1747 = vst [vmem:[#allocation13 + $0x8] sm:$0xf] %v1683
      %1748 = vst [vmem:[#allocation13 + $0xc] sm:$0xf] %v1684
      %1749 = vst [vmem:[#allocation13 + $0x10] sm:$0xf] %v1685
      %1750 = vst [vmem:[#allocation13 + $0x14] sm:$0xf] %v1686
      %1751 = vst [vmem:[#allocation13 + $0x18] sm:$0xf] %v1687
      %1752 = vst [vmem:[#allocation13 + $0x1c] sm:$0xf] %v1688
      %1753 = vst [vmem:[#allocation13 + $0x20] sm:$0xf] %v1689
      %1754 = vst [vmem:[#allocation13 + $0x24] sm:$0xf] %v1690
      %1755 = vst [vmem:[#allocation13 + $0x28] sm:$0xf] %v1691
      %1756 = vst [vmem:[#allocation13 + $0x2c] sm:$0xf] %v1692
      %1757 = vst [vmem:[#allocation13 + $0x30] sm:$0xf] %v1693
      %1758 = vst [vmem:[#allocation13 + $0x34] sm:$0xf] %v1694
      %1759 = vst [vmem:[#allocation13 + $0x38] sm:$0xf] %v1695
      %1760 = vst [vmem:[#allocation13 + $0x3c] sm:$0xf] %v1696
      %1761 = vst [vmem:[#allocation13 + $0x40] sm:$0xf] %v1697
      %1762 = vst [vmem:[#allocation13 + $0x44] sm:$0xf] %v1698
      %1763 = vst [vmem:[#allocation13 + $0x48] sm:$0xf] %v1699
      %1764 = vst [vmem:[#allocation13 + $0x4c] sm:$0xf] %v1700
      %1765 = vst [vmem:[#allocation13 + $0x50] sm:$0xf] %v1701
      %1766 = vst [vmem:[#allocation13 + $0x54] sm:$0xf] %v1702
      %1767 = vst [vmem:[#allocation13 + $0x58] sm:$0xf] %v1703
      %1768 = vst [vmem:[#allocation13 + $0x5c] sm:$0xf] %v1704
      %1769 = vst [vmem:[#allocation13 + $0x60] sm:$0xf] %v1705
      %1770 = vst [vmem:[#allocation13 + $0x64] sm:$0xf] %v1706
      %1771 = vst [vmem:[#allocation13 + $0x68] sm:$0xf] %v1707
      %1772 = vst [vmem:[#allocation13 + $0x6c] sm:$0xf] %v1708
      %1773 = vst [vmem:[#allocation13 + $0x70] sm:$0xf] %v1709
      %1774 = vst [vmem:[#allocation13 + $0x74] sm:$0xf] %v1710
      %1775 = vst [vmem:[#allocation13 + $0x78] sm:$0xf] %v1711
      %1776 = vst [vmem:[#allocation13 + $0x7c] sm:$0xf] %v1712
    $region53: #{tpu_custom_call.1} parent=1 // pred_fallthru
      _
    // Predicated region
    $region54: #{tpu_custom_call.1} parent=1 // pred_check
      _
    $region55: #{tpu_custom_call.1} parent=1 // pred_check_branch
      %1778 = sbr.rel (0) target = $region57
    $region56: #{tpu_custom_call.1} parent=1 // pred_region
      %s1780 = ssub.s32 4096, 4096
      %1781 = vsyncadd [#allocation5], %s1780
      %s1782 = sshll.u32 [#allocation12], 4
      %s1783 = int_to_ptr.vmem [resolvable:$true] %s1782
      %1788 = dma.vmem_to_hbm [thread:$0]  %s1783, 4096, %s6, [#allocation5], 128, 128, 8
    $region57: #{tpu_custom_call.1} parent=1 // pred_fallthru
      _
    // Predicated region
    $region58: #{tpu_custom_call.1} parent=1 // pred_check
      _
    $region59: #{tpu_custom_call.1} parent=1 // pred_check_branch
      %1790 = sbr.rel (0) target = $region61
    $region60: #{tpu_custom_call.1} parent=1 // pred_region
      %s1792 = ssub.s32 2048, 2048
      %1793 = vsyncadd [#allocation14], %s1792
      %s1794 = sshll.u32 [#allocation13], 4
      %s1795 = int_to_ptr.vmem [resolvable:$true] %s1794
      %1800 = dma.vmem_to_hbm [thread:$0]  %s1795, 2048, %s7, [#allocation14], 64, 64, 4
    $region61: #{tpu_custom_call.1} parent=1 // pred_fallthru
      _
    // Predicated region
    $region62: #{tpu_custom_call.1} parent=1 // pred_check
      _
    $region63: #{tpu_custom_call.1} parent=1 // pred_check_branch
      %1802 = sbr.rel (0) target = $region65
    $region64: #{tpu_custom_call.1} parent=1 // pred_region
      %1803 = dma.done [#allocation5], 4096
    $region65: #{tpu_custom_call.1} parent=1 // pred_fallthru
      _
    // Predicated region
    $region66: #{tpu_custom_call.1} parent=1 // pred_check
      _
    $region67: #{tpu_custom_call.1} parent=1 // pred_check_branch
      %1805 = sbr.rel (0) target = $region69
    $region68: #{tpu_custom_call.1} parent=1 // pred_region
      %1806 = dma.done [#allocation14], 2048
    $region69: #{tpu_custom_call.1} parent=1 // pred_fallthru
      _
    %1807 = vsyncpa [#allocation4], 1
    %1808 = vsyncpa [#allocation7], 1
    %1809 = vsyncpa [#allocation10], 1
    %1810 = vsyncpa [#allocation5], 1
    %1811 = vsyncpa [#allocation14], 1

</llo_original>
